<compile_context>
chip_gen: v7x
topology: tpu7x:2x2x1
jax: 0.10.0
libtpu: 0.0.40
codegen_flags: <defaults>
</compile_context>

<pallas_src>
import functools
import math

import jax
import jax.numpy as jnp
from jax.experimental import pallas as pl
from jax.experimental.pallas import tpu as pltpu

D_MODEL = 128          # AttentionLayer default d_model
N_HEADS = 8
D_HEAD = D_MODEL // N_HEADS
D_FF = 4 * D_MODEL
LN_EPS = 1e-5          # nn.LayerNorm default
COMPUTE_DTYPE = jnp.bfloat16
MAX_TM = 1024          # token-tile size for the M (=B*L) grid axis
ATTN_TARGET_TOKENS = 256   # target Bblk*max(L,S) per attention grid step


def _round_up(x, m):
    return (x + m - 1) // m * m


def _tile_m(M):
    """Token tile: as large as possible but >= 2 grid steps (v7x has 2 TensorCores)."""
    if M <= 8:
        return M
    tm = min(MAX_TM, _round_up((M + 1) // 2, 8))
    return min(tm, M)


def _pick_bblk(B, L, S):
    """Batch-block so Bblk*max(L,S) ~ ATTN_TARGET_TOKENS, Bblk | B, and >=2 grid steps."""
    bblk = max(1, min(B, ATTN_TARGET_TOKENS // max(L, S, 1)))
    while B % bblk != 0:
        bblk -= 1
    if B >= 2 and B // bblk < 2:          # keep both v7x TensorCores busy
        bblk = max(1, bblk // 2)
        while B % bblk != 0:
            bblk -= 1
    return bblk


# ----------------------------------------------------------------------------
# Shared in-kernel helpers
# ----------------------------------------------------------------------------
def _layer_norm(r, g, b):
    mean = jnp.mean(r, axis=-1, keepdims=True)
    var = jnp.mean(jnp.square(r - mean), axis=-1, keepdims=True)
    return (r - mean) * jax.lax.rsqrt(var + LN_EPS) * g + b


def _mha_core(q, k, v, Bblk, L, S, attn_out_list):
    """Multi-head softmax attention.

    q: (Bblk*L, D) f32; k, v: (Bblk*S, D) f32.  Returns (Bblk*L, D) bf16.
    If attn_out_list is a list, per-head (Bblk, L, S) probs are appended to it.
    """
    scale = 1.0 / math.sqrt(D_HEAD)
    # bf16 operands for the MXU; scale folded into q once (f32 accumulation below).
    qb = (q * scale).astype(COMPUTE_DTYPE).reshape(Bblk, L, D_MODEL)
    kb = k.astype(COMPUTE_DTYPE).reshape(Bblk, S, D_MODEL)
    vb = v.astype(COMPUTE_DTYPE).reshape(Bblk, S, D_MODEL)

    head_outs = []
    for h in range(N_HEADS):                       # static unroll over heads
        sl = slice(h * D_HEAD, (h + 1) * D_HEAD)
        # (Bblk, L, E) x (Bblk, S, E) -> (Bblk, L, S), batched over the batch block.
        s = jnp.einsum('ble,bse->bls', qb[:, :, sl], kb[:, :, sl],
                       preferred_element_type=jnp.float32)
        s = s - jnp.max(s, axis=-1, keepdims=True)
        p = jnp.exp(s)
        a = p * pl.reciprocal(jnp.sum(p, axis=-1, keepdims=True), approx=True)
        if attn_out_list is not None:
            attn_out_list.append(a)
        head_outs.append(
            jnp.einsum('bls,bse->ble', a.astype(COMPUTE_DTYPE), vb[:, :, sl],
                       preferred_element_type=jnp.float32))
    o = jnp.concatenate(head_outs, axis=-1)        # (Bblk, L, D) f32
    return o.reshape(Bblk * L, D_MODEL).astype(COMPUTE_DTYPE)


def _out_proj_add_ln(x_res, heads, wo, bo, g, b, o_ref, Bblk, L):
    """out-projection + residual + LayerNorm fused epilogue (x_res already in VMEM)."""
    y = jnp.dot(heads, wo, preferred_element_type=jnp.float32) + bo
    r = x_res.astype(jnp.float32) + y
    ln = _layer_norm(r, g, b)
    o_ref[...] = ln.reshape(Bblk, L, D_MODEL).astype(o_ref.dtype)


# ----------------------------------------------------------------------------
# Fused self-attention layer kernel:
#   QKV proj (single (D,3D) matmul) + per-head softmax attn + out proj + residual + LN
# ----------------------------------------------------------------------------
def _self_attn_ln_kernel(x_ref, wqkv_ref, bqkv_ref, wo_ref, bo_ref, g_ref, b_ref,
                         o_ref, *rest, Bblk, L, output_attn):
    a_ref = rest[0] if output_attn else None

    x = x_ref[...].reshape(Bblk * L, D_MODEL)       # (M, D) bf16 (free: L % 8 == 0 case)
    qkv = jnp.dot(x, wqkv_ref[...], preferred_element_type=jnp.float32) + bqkv_ref[...]
    q = qkv[:, :D_MODEL]
    k = qkv[:, D_MODEL:2 * D_MODEL]
    v = qkv[:, 2 * D_MODEL:]

    attn_rows = [] if output_attn else None
    heads = _mha_core(q, k, v, Bblk, L, L, attn_rows)

    if output_attn:
        # Head-major rows: (Bblk, H*L, S) bf16; wrapper reshapes to (B, H, L, S).
        a_ref[...] = jnp.concatenate(attn_rows, axis=1).astype(a_ref.dtype)

    _out_proj_add_ln(x, heads, wo_ref[...], bo_ref[...], g_ref[...], b_ref[...],
                     o_ref, Bblk, L)


def self_attention_ln(p, x, ln_g, ln_b, output_attn):
    """Returns (LayerNorm(x + SelfAttn(x)), attn_probs|None).  x: (B, L, D) bf16."""
    B, L, D = x.shape
    Bblk = _pick_bblk(B, L, L)
    nsteps = B // Bblk

    kernel = functools.partial(_self_attn_ln_kernel, Bblk=Bblk, L=L,
                               output_attn=output_attn)
    out_shapes = [jax.ShapeDtypeStruct((B, L, D), COMPUTE_DTYPE)]
    out_specs = [pl.BlockSpec((Bblk, L, D), lambda i: (i, 0, 0))]
    if output_attn:
        # TODO(synk): attn-prob last dim L is lane-sparse when L % 128 != 0 and VMEM grows
        # as Bblk*H*L*L; tile over heads / query blocks if probs matter for long sequences.
        out_shapes.append(jax.ShapeDtypeStruct((B, N_HEADS * L, L), COMPUTE_DTYPE))
        out_specs.append(pl.BlockSpec((Bblk, N_HEADS * L, L), lambda i: (i, 0, 0)))

    res = pl.pallas_call(
        kernel,
        out_shape=tuple(out_shapes) if output_attn else out_shapes[0],
        grid=(nsteps,),
        in_specs=[
            pl.BlockSpec((Bblk, L, D), lambda i: (i, 0, 0)),
            pl.BlockSpec((D, 3 * D), lambda i: (0, 0)),      # fused wqkv (resident)
            pl.BlockSpec((1, 3 * D), lambda i: (0, 0)),      # bqkv
            pl.BlockSpec((D, D), lambda i: (0, 0)),          # wo
            pl.BlockSpec((1, D), lambda i: (0, 0)),          # bo
            pl.BlockSpec((1, D), lambda i: (0, 0)),          # ln gamma
            pl.BlockSpec((1, D), lambda i: (0, 0)),          # ln beta
        ],
        out_specs=tuple(out_specs) if output_attn else out_specs[0],
        compiler_params=pltpu.CompilerParams(dimension_semantics=("parallel",)),
    )(x, p["wqkv"], p["bqkv"].reshape(1, 3 * D),
      p["wo"], p["bo"].reshape(1, D), ln_g.reshape(1, D), ln_b.reshape(1, D))

    if output_attn:
        out, attn = res
        attn = attn.reshape(B, N_HEADS, L, L).astype(jnp.float32)
        return out, attn
    return res, None


# ----------------------------------------------------------------------------
# Fused cross-attention layer kernel (Q proj + fused KV proj + attn + out proj + res + LN)
# ----------------------------------------------------------------------------
def _cross_attn_ln_kernel(xq_ref, xkv_ref, wq_ref, bq_ref, wkv_ref, bkv_ref,
                          wo_ref, bo_ref, g_ref, b_ref, o_ref, *, Bblk, L, S):
    xq = xq_ref[...].reshape(Bblk * L, D_MODEL)
    xkv = xkv_ref[...].reshape(Bblk * S, D_MODEL)

    q = jnp.dot(xq, wq_ref[...], preferred_element_type=jnp.float32) + bq_ref[...]
    kv = jnp.dot(xkv, wkv_ref[...], preferred_element_type=jnp.float32) + bkv_ref[...]
    k = kv[:, :D_MODEL]
    v = kv[:, D_MODEL:]

    heads = _mha_core(q, k, v, Bblk, L, S, None)
    _out_proj_add_ln(xq, heads, wo_ref[...], bo_ref[...], g_ref[...], b_ref[...],
                     o_ref, Bblk, L)


def cross_attention_ln(p, x_q, x_kv, ln_g, ln_b):
    """Returns LayerNorm(x_q + CrossAttn(x_q, x_kv)).  x_q:(B,L,D), x_kv:(B,S,D) bf16."""
    B, L, D = x_q.shape
    S = x_kv.shape[1]
    Bblk = _pick_bblk(B, L, S)
    nsteps = B // Bblk

    kernel = functools.partial(_cross_attn_ln_kernel, Bblk=Bblk, L=L, S=S)
    out = pl.pallas_call(
        kernel,
        out_shape=jax.ShapeDtypeStruct((B, L, D), COMPUTE_DTYPE),
        grid=(nsteps,),
        in_specs=[
            pl.BlockSpec((Bblk, L, D), lambda i: (i, 0, 0)),
            pl.BlockSpec((Bblk, S, D), lambda i: (i, 0, 0)),
            pl.BlockSpec((D, D), lambda i: (0, 0)),           # wq (resident)
            pl.BlockSpec((1, D), lambda i: (0, 0)),
            pl.BlockSpec((D, 2 * D), lambda i: (0, 0)),       # fused wkv
            pl.BlockSpec((1, 2 * D), lambda i: (0, 0)),
            pl.BlockSpec((D, D), lambda i: (0, 0)),           # wo
            pl.BlockSpec((1, D), lambda i: (0, 0)),
            pl.BlockSpec((1, D), lambda i: (0, 0)),           # ln gamma
            pl.BlockSpec((1, D), lambda i: (0, 0)),           # ln beta
        ],
        out_specs=pl.BlockSpec((Bblk, L, D), lambda i: (i, 0, 0)),
        compiler_params=pltpu.CompilerParams(dimension_semantics=("parallel",)),
    )(x_q, x_kv,
      p["wq"], p["bq"].reshape(1, D),
      p["wkv"], p["bkv"].reshape(1, 2 * D),
      p["wo"], p["bo"].reshape(1, D),
      ln_g.reshape(1, D), ln_b.reshape(1, D))
    return out


# ----------------------------------------------------------------------------
# Fused FFN (1x1 conv -> ReLU -> 1x1 conv) + residual + LayerNorm + optional gate
# ----------------------------------------------------------------------------
def _ffn_ln_kernel(x_ref, w1_ref, b1_ref, w2_ref, b2_ref, g_ref, b_ref, o_ref, *, gated):
    x = x_ref[...]                                                            # (tm, D) bf16
    h = jnp.dot(x, w1_ref[...], preferred_element_type=jnp.float32) + b1_ref[...]
    h = jnp.maximum(h, 0.0).astype(COMPUTE_DTYPE)                             # (tm, D_FF)
    y = jnp.dot(h, w2_ref[...], preferred_element_type=jnp.float32) + b2_ref[...]

    out = y[:, :D_MODEL]
    r = x.astype(jnp.float32) + out
    ln = _layer_norm(r, g_ref[...], b_ref[...])
    if gated:
        ln = ln * jax.nn.sigmoid(y[:, D_MODEL:])
    o_ref[...] = ln.astype(o_ref.dtype)


def ffn_ln(p, x, ln_g, ln_b, gated):
    """out = LayerNorm(x + conv2(relu(conv1(x)))[..., :D]) [* sigmoid(gate)]."""
    B, L, D = x.shape
    M = B * L
    tm = _tile_m(M)

    if gated:
        w2, b2, n2 = p["conv2_w"], p["conv2_b"], 2 * D_MODEL
    else:
        # Ungated path never needs the gate columns: halve conv2 work + resident weight.
        w2, b2, n2 = p["conv2_w"][:, :D_MODEL], p["conv2_b"][:D_MODEL], D_MODEL

    kernel = functools.partial(_ffn_ln_kernel, gated=gated)
    out = pl.pallas_call(
        kernel,
        out_shape=jax.ShapeDtypeStruct((M, D), COMPUTE_DTYPE),
        grid=(pl.cdiv(M, tm),),
        in_specs=[
            pl.BlockSpec((tm, D), lambda i: (i, 0)),
            pl.BlockSpec((D, D_FF), lambda i: (0, 0)),          # conv1 weight (resident)
            pl.BlockSpec((1, D_FF), lambda i: (0, 0)),
            pl.BlockSpec((D_FF, n2), lambda i: (0, 0)),         # conv2 weight (resident)
            pl.BlockSpec((1, n2), lambda i: (0, 0)),
            pl.BlockSpec((1, D), lambda i: (0, 0)),
            pl.BlockSpec((1, D), lambda i: (0, 0)),
        ],
        out_specs=pl.BlockSpec((tm, D), lambda i: (i, 0)),
        compiler_params=pltpu.CompilerParams(dimension_semantics=("parallel",)),
    )(x.reshape(M, D),
      p["conv1_w"], p["conv1_b"].reshape(1, D_FF),
      w2, b2.reshape(1, n2),
      ln_g.reshape(1, D), ln_b.reshape(1, D))
    return out.reshape(B, L, D)


# ----------------------------------------------------------------------------
# Layer / model forward (dropout = identity, eval mode; attn_mask = None)
# ----------------------------------------------------------------------------
def encoder_layer_fwd(p, x, gate_flag=False):
    x1, attn = self_attention_ln(p["attn"], x, p["ln1_g"], p["ln1_b"], output_attn=True)
    out = ffn_ln(p, x1, p["ln2_g"], p["ln2_b"], gate_flag)
    return out, attn


def decoder_layer_fwd(p, x, cross, gate_flag=False):
    # TODO(synk): reference applies no causal/padding mask to decoder self-attention.
    x1, _ = self_attention_ln(p["self_attn"], x, p["ln1_g"], p["ln1_b"], output_attn=False)
    x2 = cross_attention_ln(p["cross_attn"], x1, cross, p["ln2_g"], p["ln2_b"])
    out = ffn_ln(p, x2, p["ln3_g"], p["ln3_b"], gate_flag)
    return out


def gated_transformer_fwd(params, x_enc, x_dec, gate_flag=False):
    enc_out = x_enc.astype(COMPUTE_DTYPE)
    attns = []
    for lp in params["encoder"]:
        enc_out, attn = encoder_layer_fwd(lp, enc_out, gate_flag)
        attns.append(attn)
    dec_out = x_dec.astype(COMPUTE_DTYPE)
    for lp in params["decoder"]:
        dec_out = decoder_layer_fwd(lp, dec_out, enc_out, gate_flag)
    return dec_out.astype(jnp.float32), attns


# ----------------------------------------------------------------------------
# Deterministic parameter init (matches nn.Linear / Conv1d(k=1) shapes)
# ----------------------------------------------------------------------------
def _init_linear(key, din, dout):
    kw, kb = jax.random.split(key)
    lim = 1.0 / math.sqrt(din)
    w = jax.random.uniform(kw, (din, dout), jnp.float32, -lim, lim)
    b = jax.random.uniform(kb, (dout,), jnp.float32, -lim, lim)
    return w, b


def _init_attention(key, fuse_qkv):
    ks = jax.random.split(key, 4)
    wq, bq = _init_linear(ks[0], D_MODEL, D_MODEL)
    wk, bk = _init_linear(ks[1], D_MODEL, D_MODEL)
    wv, bv = _init_linear(ks[2], D_MODEL, D_MODEL)
    wo, bo = _init_linear(ks[3], D_MODEL, D_MODEL)
    if fuse_qkv:   # self-attention: single (D, 3D) projection
        return dict(
            wqkv=jnp.concatenate([wq, wk, wv], axis=1).astype(COMPUTE_DTYPE),
            bqkv=jnp.concatenate([bq, bk, bv], axis=0),
            wo=wo.astype(COMPUTE_DTYPE), bo=bo)
    return dict(   # cross-attention: Q separate, K/V fused
        wq=wq.astype(COMPUTE_DTYPE), bq=bq,
        wkv=jnp.concatenate([wk, wv], axis=1).astype(COMPUTE_DTYPE),
        bkv=jnp.concatenate([bk, bv], axis=0),
        wo=wo.astype(COMPUTE_DTYPE), bo=bo)


def _init_ffn(k1, k2):
    c1w, c1b = _init_linear(k1, D_MODEL, D_FF)
    c2w, c2b = _init_linear(k2, D_FF, 2 * D_MODEL)
    return dict(conv1_w=c1w.astype(COMPUTE_DTYPE), conv1_b=c1b,
                conv2_w=c2w.astype(COMPUTE_DTYPE), conv2_b=c2b)


def _init_encoder_layer(key):
    ks = jax.random.split(key, 3)
    d = dict(attn=_init_attention(ks[0], fuse_qkv=True))
    d.update(_init_ffn(ks[1], ks[2]))
    d.update(ln1_g=jnp.ones((D_MODEL,), jnp.float32), ln1_b=jnp.zeros((D_MODEL,), jnp.float32),
             ln2_g=jnp.ones((D_MODEL,), jnp.float32), ln2_b=jnp.zeros((D_MODEL,), jnp.float32))
    return d


def _init_decoder_layer(key):
    ks = jax.random.split(key, 4)
    d = dict(self_attn=_init_attention(ks[0], fuse_qkv=True),
             cross_attn=_init_attention(ks[1], fuse_qkv=False))
    d.update(_init_ffn(ks[2], ks[3]))
    d.update(ln1_g=jnp.ones((D_MODEL,), jnp.float32), ln1_b=jnp.zeros((D_MODEL,), jnp.float32),
             ln2_g=jnp.ones((D_MODEL,), jnp.float32), ln2_b=jnp.zeros((D_MODEL,), jnp.float32),
             ln3_g=jnp.ones((D_MODEL,), jnp.float32), ln3_b=jnp.zeros((D_MODEL,), jnp.float32))
    return d


def init_params(key, num_encoder_layers=1, num_decoder_layers=1):
    k_enc, k_dec = jax.random.split(key)
    enc_keys = jax.random.split(k_enc, num_encoder_layers)
    dec_keys = jax.random.split(k_dec, num_decoder_layers)
    return dict(
        encoder=[_init_encoder_layer(k) for k in enc_keys],
        decoder=[_init_decoder_layer(k) for k in dec_keys],
    )


# ----------------------------------------------------------------------------
if __name__ == "__main__":
    key = jax.random.PRNGKey(0)
    k_params, k_enc_in, k_dec_in = jax.random.split(key, 3)

    B, L_ENC, L_DEC = 2, 8, 8
    params = init_params(k_params, num_encoder_layers=1, num_decoder_layers=1)

    x_enc = jax.random.normal(k_enc_in, (B, L_ENC, D_MODEL), jnp.float32)
    x_dec = jax.random.normal(k_dec_in, (B, L_DEC, D_MODEL), jnp.float32)

    # Ungated path (module default gate=False).
    out, attns = gated_transformer_fwd(params, x_enc, x_dec, gate_flag=False)
    out = jax.block_until_ready(out)
    attns = [jax.block_until_ready(a) for a in attns]
    assert out.shape == (B, L_DEC, D_MODEL)
    assert attns[0].shape == (B, N_HEADS, L_ENC, L_ENC)
    assert bool(jnp.all(jnp.isfinite(out)))
    assert bool(jnp.all(jnp.isfinite(attns[0])))

    # Gated path (exercises the sigmoid-gate kernel variant).
    out_g, _ = gated_transformer_fwd(params, x_enc, x_dec, gate_flag=True)
    out_g = jax.block_until_ready(out_g)
    assert out_g.shape == (B, L_DEC, D_MODEL)
    assert bool(jnp.all(jnp.isfinite(out_g)))

    print("KERNEL_OK")
</pallas_src>

<mosaic_0001>
module attributes {stable_mosaic.version = 11 : i64} {
  func.func @_self_attn_ln_kernel(%arg0: i32, %arg1: memref<1x8x128xbf16, #tpu.memory_space<vmem>>, %arg2: memref<128x384xbf16, #tpu.memory_space<vmem>>, %arg3: memref<1x384xf32, #tpu.memory_space<vmem>>, %arg4: memref<128x128xbf16, #tpu.memory_space<vmem>>, %arg5: memref<1x128xf32, #tpu.memory_space<vmem>>, %arg6: memref<1x128xf32, #tpu.memory_space<vmem>>, %arg7: memref<1x128xf32, #tpu.memory_space<vmem>>, %arg8: memref<1x8x128xbf16, #tpu.memory_space<vmem>>, %arg9: memref<1x64x8xbf16, #tpu.memory_space<vmem>>) attributes {dimension_semantics = [#tpu.dimension_semantics<parallel>], iteration_bounds = array<i64: 2>, scalar_prefetch = 0 : i64, scratch_operands = 0 : i64, tpu.core_type = #tpu.core_type<tc>, window_params = [{transform_indices = @transform_0, window_bounds = array<i64: 1, 8, 128>}, {pipeline_mode = #tpu.pipeline_mode<synchronous>, transform_indices = @transform_1, window_bounds = array<i64: 128, 384>}, {pipeline_mode = #tpu.pipeline_mode<synchronous>, transform_indices = @transform_2, window_bounds = array<i64: 1, 384>}, {pipeline_mode = #tpu.pipeline_mode<synchronous>, transform_indices = @transform_3, window_bounds = array<i64: 128, 128>}, {pipeline_mode = #tpu.pipeline_mode<synchronous>, transform_indices = @transform_4, window_bounds = array<i64: 1, 128>}, {pipeline_mode = #tpu.pipeline_mode<synchronous>, transform_indices = @transform_5, window_bounds = array<i64: 1, 128>}, {pipeline_mode = #tpu.pipeline_mode<synchronous>, transform_indices = @transform_6, window_bounds = array<i64: 1, 128>}, {transform_indices = @transform_7, window_bounds = array<i64: 1, 8, 128>}, {transform_indices = @transform_8, window_bounds = array<i64: 1, 64, 8>}]} {
    %c0 = arith.constant 0 : index
    %c0_0 = arith.constant 0 : index
    %c0_1 = arith.constant 0 : index
    %0 = vector.load %arg1[%c0, %c0_0, %c0_1] : memref<1x8x128xbf16, #tpu.memory_space<vmem>>, vector<1x8x128xbf16>
    %1 = vector.shape_cast %0 : vector<1x8x128xbf16> to vector<8x128xbf16>
    %c0_2 = arith.constant 0 : index
    %c0_3 = arith.constant 0 : index
    %2 = vector.load %arg2[%c0_2, %c0_3] : memref<128x384xbf16, #tpu.memory_space<vmem>>, vector<128x384xbf16>
    %cst = arith.constant dense<0.000000e+00> : vector<8x384xf32>
    %3 = tpu.matmul %1, %2, %cst {dimension_numbers = #tpu.dot_dimension_numbers<[1], [0], [0], [1], [0, 0, 1, 1], [], []>} : vector<8x128xbf16>, vector<128x384xbf16>, vector<8x384xf32> -> vector<8x384xf32>
    %c0_4 = arith.constant 0 : index
    %c0_5 = arith.constant 0 : index
    %4 = vector.load %arg3[%c0_4, %c0_5] : memref<1x384xf32, #tpu.memory_space<vmem>>, vector<1x384xf32>
    %5 = vector.broadcast %4 : vector<1x384xf32> to vector<8x384xf32>
    %6 = arith.addf %3, %5 : vector<8x384xf32>
    %7 = vector.extract_strided_slice %6 {offsets = [0, 0], sizes = [8, 128], strides = [1, 1]} : vector<8x384xf32> to vector<8x128xf32>
    %8 = vector.extract_strided_slice %6 {offsets = [0, 128], sizes = [8, 128], strides = [1, 1]} : vector<8x384xf32> to vector<8x128xf32>
    %9 = vector.extract_strided_slice %6 {offsets = [0, 256], sizes = [8, 128], strides = [1, 1]} : vector<8x384xf32> to vector<8x128xf32>
    %cst_6 = arith.constant 2.500000e-01 : f32
    %10 = vector.broadcast %cst_6 : f32 to vector<8x128xf32>
    %11 = arith.mulf %7, %10 : vector<8x128xf32>
    %12 = arith.truncf %11 : vector<8x128xf32> to vector<8x128xbf16>
    %13 = vector.shape_cast %12 : vector<8x128xbf16> to vector<1x8x128xbf16>
    %14 = arith.truncf %8 : vector<8x128xf32> to vector<8x128xbf16>
    %15 = vector.shape_cast %14 : vector<8x128xbf16> to vector<1x8x128xbf16>
    %16 = arith.truncf %9 : vector<8x128xf32> to vector<8x128xbf16>
    %17 = vector.shape_cast %16 : vector<8x128xbf16> to vector<1x8x128xbf16>
    %18 = vector.extract_strided_slice %13 {offsets = [0, 0, 0], sizes = [1, 8, 16], strides = [1, 1, 1]} : vector<1x8x128xbf16> to vector<1x8x16xbf16>
    %19 = vector.extract_strided_slice %15 {offsets = [0, 0, 0], sizes = [1, 8, 16], strides = [1, 1, 1]} : vector<1x8x128xbf16> to vector<1x8x16xbf16>
    "tpu.trace_start"() <{level = 10 : i32, message = "ble,bse->bls"}> : () -> ()
    %cst_7 = arith.constant dense<0.000000e+00> : vector<1x8x8xf32>
    %20 = tpu.matmul %18, %19, %cst_7 {dimension_numbers = #tpu.dot_dimension_numbers<[2], [2], [1], [1], [0, 0, 0, 1, 1, 1], [0], [0]>} : vector<1x8x16xbf16>, vector<1x8x16xbf16>, vector<1x8x8xf32> -> vector<1x8x8xf32>
    "tpu.trace_stop"() : () -> ()
    %cst_8 = arith.constant dense<0xFF800000> : vector<1x8xf32>
    %21 = vector.multi_reduction <maximumf>, %20, %cst_8 [2] : vector<1x8x8xf32> to vector<1x8xf32>
    %22 = vector.shape_cast %21 : vector<1x8xf32> to vector<1x8x1xf32>
    %23 = vector.broadcast %22 : vector<1x8x1xf32> to vector<1x8x8xf32>
    %24 = arith.subf %20, %23 : vector<1x8x8xf32>
    %25 = math.exp %24 : vector<1x8x8xf32>
    %cst_9 = arith.constant dense<0.000000e+00> : vector<1x8xf32>
    %26 = vector.multi_reduction <add>, %25, %cst_9 [2] : vector<1x8x8xf32> to vector<1x8xf32>
    %27 = vector.shape_cast %26 : vector<1x8xf32> to vector<1x8x1xf32>
    %28 = tpu.reciprocal %27 {approx = true} : vector<1x8x1xf32> -> vector<1x8x1xf32>
    %29 = vector.broadcast %28 : vector<1x8x1xf32> to vector<1x8x8xf32>
    %30 = arith.mulf %25, %29 : vector<1x8x8xf32>
    %31 = arith.truncf %30 : vector<1x8x8xf32> to vector<1x8x8xbf16>
    %32 = vector.extract_strided_slice %17 {offsets = [0, 0, 0], sizes = [1, 8, 16], strides = [1, 1, 1]} : vector<1x8x128xbf16> to vector<1x8x16xbf16>
    "tpu.trace_start"() <{level = 10 : i32, message = "bls,bse->ble"}> : () -> ()
    %cst_10 = arith.constant dense<0.000000e+00> : vector<1x8x16xf32>
    %33 = tpu.matmul %31, %32, %cst_10 {dimension_numbers = #tpu.dot_dimension_numbers<[2], [1], [1], [2], [0, 0, 0, 1, 1, 2], [0], [0]>} : vector<1x8x8xbf16>, vector<1x8x16xbf16>, vector<1x8x16xf32> -> vector<1x8x16xf32>
    "tpu.trace_stop"() : () -> ()
    %34 = vector.extract_strided_slice %13 {offsets = [0, 0, 16], sizes = [1, 8, 16], strides = [1, 1, 1]} : vector<1x8x128xbf16> to vector<1x8x16xbf16>
    %35 = vector.extract_strided_slice %15 {offsets = [0, 0, 16], sizes = [1, 8, 16], strides = [1, 1, 1]} : vector<1x8x128xbf16> to vector<1x8x16xbf16>
    "tpu.trace_start"() <{level = 10 : i32, message = "ble,bse->bls"}> : () -> ()
    %cst_11 = arith.constant dense<0.000000e+00> : vector<1x8x8xf32>
    %36 = tpu.matmul %34, %35, %cst_11 {dimension_numbers = #tpu.dot_dimension_numbers<[2], [2], [1], [1], [0, 0, 0, 1, 1, 1], [0], [0]>} : vector<1x8x16xbf16>, vector<1x8x16xbf16>, vector<1x8x8xf32> -> vector<1x8x8xf32>
    "tpu.trace_stop"() : () -> ()
    %cst_12 = arith.constant dense<0xFF800000> : vector<1x8xf32>
    %37 = vector.multi_reduction <maximumf>, %36, %cst_12 [2] : vector<1x8x8xf32> to vector<1x8xf32>
    %38 = vector.shape_cast %37 : vector<1x8xf32> to vector<1x8x1xf32>
    %39 = vector.broadcast %38 : vector<1x8x1xf32> to vector<1x8x8xf32>
    %40 = arith.subf %36, %39 : vector<1x8x8xf32>
    %41 = math.exp %40 : vector<1x8x8xf32>
    %cst_13 = arith.constant dense<0.000000e+00> : vector<1x8xf32>
    %42 = vector.multi_reduction <add>, %41, %cst_13 [2] : vector<1x8x8xf32> to vector<1x8xf32>
    %43 = vector.shape_cast %42 : vector<1x8xf32> to vector<1x8x1xf32>
    %44 = tpu.reciprocal %43 {approx = true} : vector<1x8x1xf32> -> vector<1x8x1xf32>
    %45 = vector.broadcast %44 : vector<1x8x1xf32> to vector<1x8x8xf32>
    %46 = arith.mulf %41, %45 : vector<1x8x8xf32>
    %47 = arith.truncf %46 : vector<1x8x8xf32> to vector<1x8x8xbf16>
    %48 = vector.extract_strided_slice %17 {offsets = [0, 0, 16], sizes = [1, 8, 16], strides = [1, 1, 1]} : vector<1x8x128xbf16> to vector<1x8x16xbf16>
    "tpu.trace_start"() <{level = 10 : i32, message = "bls,bse->ble"}> : () -> ()
    %cst_14 = arith.constant dense<0.000000e+00> : vector<1x8x16xf32>
    %49 = tpu.matmul %47, %48, %cst_14 {dimension_numbers = #tpu.dot_dimension_numbers<[2], [1], [1], [2], [0, 0, 0, 1, 1, 2], [0], [0]>} : vector<1x8x8xbf16>, vector<1x8x16xbf16>, vector<1x8x16xf32> -> vector<1x8x16xf32>
    "tpu.trace_stop"() : () -> ()
    %50 = vector.extract_strided_slice %13 {offsets = [0, 0, 32], sizes = [1, 8, 16], strides = [1, 1, 1]} : vector<1x8x128xbf16> to vector<1x8x16xbf16>
    %51 = vector.extract_strided_slice %15 {offsets = [0, 0, 32], sizes = [1, 8, 16], strides = [1, 1, 1]} : vector<1x8x128xbf16> to vector<1x8x16xbf16>
    "tpu.trace_start"() <{level = 10 : i32, message = "ble,bse->bls"}> : () -> ()
    %cst_15 = arith.constant dense<0.000000e+00> : vector<1x8x8xf32>
    %52 = tpu.matmul %50, %51, %cst_15 {dimension_numbers = #tpu.dot_dimension_numbers<[2], [2], [1], [1], [0, 0, 0, 1, 1, 1], [0], [0]>} : vector<1x8x16xbf16>, vector<1x8x16xbf16>, vector<1x8x8xf32> -> vector<1x8x8xf32>
    "tpu.trace_stop"() : () -> ()
    %cst_16 = arith.constant dense<0xFF800000> : vector<1x8xf32>
    %53 = vector.multi_reduction <maximumf>, %52, %cst_16 [2] : vector<1x8x8xf32> to vector<1x8xf32>
    %54 = vector.shape_cast %53 : vector<1x8xf32> to vector<1x8x1xf32>
    %55 = vector.broadcast %54 : vector<1x8x1xf32> to vector<1x8x8xf32>
    %56 = arith.subf %52, %55 : vector<1x8x8xf32>
    %57 = math.exp %56 : vector<1x8x8xf32>
    %cst_17 = arith.constant dense<0.000000e+00> : vector<1x8xf32>
    %58 = vector.multi_reduction <add>, %57, %cst_17 [2] : vector<1x8x8xf32> to vector<1x8xf32>
    %59 = vector.shape_cast %58 : vector<1x8xf32> to vector<1x8x1xf32>
    %60 = tpu.reciprocal %59 {approx = true} : vector<1x8x1xf32> -> vector<1x8x1xf32>
    %61 = vector.broadcast %60 : vector<1x8x1xf32> to vector<1x8x8xf32>
    %62 = arith.mulf %57, %61 : vector<1x8x8xf32>
    %63 = arith.truncf %62 : vector<1x8x8xf32> to vector<1x8x8xbf16>
    %64 = vector.extract_strided_slice %17 {offsets = [0, 0, 32], sizes = [1, 8, 16], strides = [1, 1, 1]} : vector<1x8x128xbf16> to vector<1x8x16xbf16>
    "tpu.trace_start"() <{level = 10 : i32, message = "bls,bse->ble"}> : () -> ()
    %cst_18 = arith.constant dense<0.000000e+00> : vector<1x8x16xf32>
    %65 = tpu.matmul %63, %64, %cst_18 {dimension_numbers = #tpu.dot_dimension_numbers<[2], [1], [1], [2], [0, 0, 0, 1, 1, 2], [0], [0]>} : vector<1x8x8xbf16>, vector<1x8x16xbf16>, vector<1x8x16xf32> -> vector<1x8x16xf32>
    "tpu.trace_stop"() : () -> ()
    %66 = vector.extract_strided_slice %13 {offsets = [0, 0, 48], sizes = [1, 8, 16], strides = [1, 1, 1]} : vector<1x8x128xbf16> to vector<1x8x16xbf16>
    %67 = vector.extract_strided_slice %15 {offsets = [0, 0, 48], sizes = [1, 8, 16], strides = [1, 1, 1]} : vector<1x8x128xbf16> to vector<1x8x16xbf16>
    "tpu.trace_start"() <{level = 10 : i32, message = "ble,bse->bls"}> : () -> ()
    %cst_19 = arith.constant dense<0.000000e+00> : vector<1x8x8xf32>
    %68 = tpu.matmul %66, %67, %cst_19 {dimension_numbers = #tpu.dot_dimension_numbers<[2], [2], [1], [1], [0, 0, 0, 1, 1, 1], [0], [0]>} : vector<1x8x16xbf16>, vector<1x8x16xbf16>, vector<1x8x8xf32> -> vector<1x8x8xf32>
    "tpu.trace_stop"() : () -> ()
    %cst_20 = arith.constant dense<0xFF800000> : vector<1x8xf32>
    %69 = vector.multi_reduction <maximumf>, %68, %cst_20 [2] : vector<1x8x8xf32> to vector<1x8xf32>
    %70 = vector.shape_cast %69 : vector<1x8xf32> to vector<1x8x1xf32>
    %71 = vector.broadcast %70 : vector<1x8x1xf32> to vector<1x8x8xf32>
    %72 = arith.subf %68, %71 : vector<1x8x8xf32>
    %73 = math.exp %72 : vector<1x8x8xf32>
    %cst_21 = arith.constant dense<0.000000e+00> : vector<1x8xf32>
    %74 = vector.multi_reduction <add>, %73, %cst_21 [2] : vector<1x8x8xf32> to vector<1x8xf32>
    %75 = vector.shape_cast %74 : vector<1x8xf32> to vector<1x8x1xf32>
    %76 = tpu.reciprocal %75 {approx = true} : vector<1x8x1xf32> -> vector<1x8x1xf32>
    %77 = vector.broadcast %76 : vector<1x8x1xf32> to vector<1x8x8xf32>
    %78 = arith.mulf %73, %77 : vector<1x8x8xf32>
    %79 = arith.truncf %78 : vector<1x8x8xf32> to vector<1x8x8xbf16>
    %80 = vector.extract_strided_slice %17 {offsets = [0, 0, 48], sizes = [1, 8, 16], strides = [1, 1, 1]} : vector<1x8x128xbf16> to vector<1x8x16xbf16>
    "tpu.trace_start"() <{level = 10 : i32, message = "bls,bse->ble"}> : () -> ()
    %cst_22 = arith.constant dense<0.000000e+00> : vector<1x8x16xf32>
    %81 = tpu.matmul %79, %80, %cst_22 {dimension_numbers = #tpu.dot_dimension_numbers<[2], [1], [1], [2], [0, 0, 0, 1, 1, 2], [0], [0]>} : vector<1x8x8xbf16>, vector<1x8x16xbf16>, vector<1x8x16xf32> -> vector<1x8x16xf32>
    "tpu.trace_stop"() : () -> ()
    %82 = vector.extract_strided_slice %13 {offsets = [0, 0, 64], sizes = [1, 8, 16], strides = [1, 1, 1]} : vector<1x8x128xbf16> to vector<1x8x16xbf16>
    %83 = vector.extract_strided_slice %15 {offsets = [0, 0, 64], sizes = [1, 8, 16], strides = [1, 1, 1]} : vector<1x8x128xbf16> to vector<1x8x16xbf16>
    "tpu.trace_start"() <{level = 10 : i32, message = "ble,bse->bls"}> : () -> ()
    %cst_23 = arith.constant dense<0.000000e+00> : vector<1x8x8xf32>
    %84 = tpu.matmul %82, %83, %cst_23 {dimension_numbers = #tpu.dot_dimension_numbers<[2], [2], [1], [1], [0, 0, 0, 1, 1, 1], [0], [0]>} : vector<1x8x16xbf16>, vector<1x8x16xbf16>, vector<1x8x8xf32> -> vector<1x8x8xf32>
    "tpu.trace_stop"() : () -> ()
    %cst_24 = arith.constant dense<0xFF800000> : vector<1x8xf32>
    %85 = vector.multi_reduction <maximumf>, %84, %cst_24 [2] : vector<1x8x8xf32> to vector<1x8xf32>
    %86 = vector.shape_cast %85 : vector<1x8xf32> to vector<1x8x1xf32>
    %87 = vector.broadcast %86 : vector<1x8x1xf32> to vector<1x8x8xf32>
    %88 = arith.subf %84, %87 : vector<1x8x8xf32>
    %89 = math.exp %88 : vector<1x8x8xf32>
    %cst_25 = arith.constant dense<0.000000e+00> : vector<1x8xf32>
    %90 = vector.multi_reduction <add>, %89, %cst_25 [2] : vector<1x8x8xf32> to vector<1x8xf32>
    %91 = vector.shape_cast %90 : vector<1x8xf32> to vector<1x8x1xf32>
    %92 = tpu.reciprocal %91 {approx = true} : vector<1x8x1xf32> -> vector<1x8x1xf32>
    %93 = vector.broadcast %92 : vector<1x8x1xf32> to vector<1x8x8xf32>
    %94 = arith.mulf %89, %93 : vector<1x8x8xf32>
    %95 = arith.truncf %94 : vector<1x8x8xf32> to vector<1x8x8xbf16>
    %96 = vector.extract_strided_slice %17 {offsets = [0, 0, 64], sizes = [1, 8, 16], strides = [1, 1, 1]} : vector<1x8x128xbf16> to vector<1x8x16xbf16>
    "tpu.trace_start"() <{level = 10 : i32, message = "bls,bse->ble"}> : () -> ()
    %cst_26 = arith.constant dense<0.000000e+00> : vector<1x8x16xf32>
    %97 = tpu.matmul %95, %96, %cst_26 {dimension_numbers = #tpu.dot_dimension_numbers<[2], [1], [1], [2], [0, 0, 0, 1, 1, 2], [0], [0]>} : vector<1x8x8xbf16>, vector<1x8x16xbf16>, vector<1x8x16xf32> -> vector<1x8x16xf32>
    "tpu.trace_stop"() : () -> ()
    %98 = vector.extract_strided_slice %13 {offsets = [0, 0, 80], sizes = [1, 8, 16], strides = [1, 1, 1]} : vector<1x8x128xbf16> to vector<1x8x16xbf16>
    %99 = vector.extract_strided_slice %15 {offsets = [0, 0, 80], sizes = [1, 8, 16], strides = [1, 1, 1]} : vector<1x8x128xbf16> to vector<1x8x16xbf16>
    "tpu.trace_start"() <{level = 10 : i32, message = "ble,bse->bls"}> : () -> ()
    %cst_27 = arith.constant dense<0.000000e+00> : vector<1x8x8xf32>
    %100 = tpu.matmul %98, %99, %cst_27 {dimension_numbers = #tpu.dot_dimension_numbers<[2], [2], [1], [1], [0, 0, 0, 1, 1, 1], [0], [0]>} : vector<1x8x16xbf16>, vector<1x8x16xbf16>, vector<1x8x8xf32> -> vector<1x8x8xf32>
    "tpu.trace_stop"() : () -> ()
    %cst_28 = arith.constant dense<0xFF800000> : vector<1x8xf32>
    %101 = vector.multi_reduction <maximumf>, %100, %cst_28 [2] : vector<1x8x8xf32> to vector<1x8xf32>
    %102 = vector.shape_cast %101 : vector<1x8xf32> to vector<1x8x1xf32>
    %103 = vector.broadcast %102 : vector<1x8x1xf32> to vector<1x8x8xf32>
    %104 = arith.subf %100, %103 : vector<1x8x8xf32>
    %105 = math.exp %104 : vector<1x8x8xf32>
    %cst_29 = arith.constant dense<0.000000e+00> : vector<1x8xf32>
    %106 = vector.multi_reduction <add>, %105, %cst_29 [2] : vector<1x8x8xf32> to vector<1x8xf32>
    %107 = vector.shape_cast %106 : vector<1x8xf32> to vector<1x8x1xf32>
    %108 = tpu.reciprocal %107 {approx = true} : vector<1x8x1xf32> -> vector<1x8x1xf32>
    %109 = vector.broadcast %108 : vector<1x8x1xf32> to vector<1x8x8xf32>
    %110 = arith.mulf %105, %109 : vector<1x8x8xf32>
    %111 = arith.truncf %110 : vector<1x8x8xf32> to vector<1x8x8xbf16>
    %112 = vector.extract_strided_slice %17 {offsets = [0, 0, 80], sizes = [1, 8, 16], strides = [1, 1, 1]} : vector<1x8x128xbf16> to vector<1x8x16xbf16>
    "tpu.trace_start"() <{level = 10 : i32, message = "bls,bse->ble"}> : () -> ()
    %cst_30 = arith.constant dense<0.000000e+00> : vector<1x8x16xf32>
    %113 = tpu.matmul %111, %112, %cst_30 {dimension_numbers = #tpu.dot_dimension_numbers<[2], [1], [1], [2], [0, 0, 0, 1, 1, 2], [0], [0]>} : vector<1x8x8xbf16>, vector<1x8x16xbf16>, vector<1x8x16xf32> -> vector<1x8x16xf32>
    "tpu.trace_stop"() : () -> ()
    %114 = vector.extract_strided_slice %13 {offsets = [0, 0, 96], sizes = [1, 8, 16], strides = [1, 1, 1]} : vector<1x8x128xbf16> to vector<1x8x16xbf16>
    %115 = vector.extract_strided_slice %15 {offsets = [0, 0, 96], sizes = [1, 8, 16], strides = [1, 1, 1]} : vector<1x8x128xbf16> to vector<1x8x16xbf16>
    "tpu.trace_start"() <{level = 10 : i32, message = "ble,bse->bls"}> : () -> ()
    %cst_31 = arith.constant dense<0.000000e+00> : vector<1x8x8xf32>
    %116 = tpu.matmul %114, %115, %cst_31 {dimension_numbers = #tpu.dot_dimension_numbers<[2], [2], [1], [1], [0, 0, 0, 1, 1, 1], [0], [0]>} : vector<1x8x16xbf16>, vector<1x8x16xbf16>, vector<1x8x8xf32> -> vector<1x8x8xf32>
    "tpu.trace_stop"() : () -> ()
    %cst_32 = arith.constant dense<0xFF800000> : vector<1x8xf32>
    %117 = vector.multi_reduction <maximumf>, %116, %cst_32 [2] : vector<1x8x8xf32> to vector<1x8xf32>
    %118 = vector.shape_cast %117 : vector<1x8xf32> to vector<1x8x1xf32>
    %119 = vector.broadcast %118 : vector<1x8x1xf32> to vector<1x8x8xf32>
    %120 = arith.subf %116, %119 : vector<1x8x8xf32>
    %121 = math.exp %120 : vector<1x8x8xf32>
    %cst_33 = arith.constant dense<0.000000e+00> : vector<1x8xf32>
    %122 = vector.multi_reduction <add>, %121, %cst_33 [2] : vector<1x8x8xf32> to vector<1x8xf32>
    %123 = vector.shape_cast %122 : vector<1x8xf32> to vector<1x8x1xf32>
    %124 = tpu.reciprocal %123 {approx = true} : vector<1x8x1xf32> -> vector<1x8x1xf32>
    %125 = vector.broadcast %124 : vector<1x8x1xf32> to vector<1x8x8xf32>
    %126 = arith.mulf %121, %125 : vector<1x8x8xf32>
    %127 = arith.truncf %126 : vector<1x8x8xf32> to vector<1x8x8xbf16>
    %128 = vector.extract_strided_slice %17 {offsets = [0, 0, 96], sizes = [1, 8, 16], strides = [1, 1, 1]} : vector<1x8x128xbf16> to vector<1x8x16xbf16>
    "tpu.trace_start"() <{level = 10 : i32, message = "bls,bse->ble"}> : () -> ()
    %cst_34 = arith.constant dense<0.000000e+00> : vector<1x8x16xf32>
    %129 = tpu.matmul %127, %128, %cst_34 {dimension_numbers = #tpu.dot_dimension_numbers<[2], [1], [1], [2], [0, 0, 0, 1, 1, 2], [0], [0]>} : vector<1x8x8xbf16>, vector<1x8x16xbf16>, vector<1x8x16xf32> -> vector<1x8x16xf32>
    "tpu.trace_stop"() : () -> ()
    %130 = vector.extract_strided_slice %13 {offsets = [0, 0, 112], sizes = [1, 8, 16], strides = [1, 1, 1]} : vector<1x8x128xbf16> to vector<1x8x16xbf16>
    %131 = vector.extract_strided_slice %15 {offsets = [0, 0, 112], sizes = [1, 8, 16], strides = [1, 1, 1]} : vector<1x8x128xbf16> to vector<1x8x16xbf16>
    "tpu.trace_start"() <{level = 10 : i32, message = "ble,bse->bls"}> : () -> ()
    %cst_35 = arith.constant dense<0.000000e+00> : vector<1x8x8xf32>
    %132 = tpu.matmul %130, %131, %cst_35 {dimension_numbers = #tpu.dot_dimension_numbers<[2], [2], [1], [1], [0, 0, 0, 1, 1, 1], [0], [0]>} : vector<1x8x16xbf16>, vector<1x8x16xbf16>, vector<1x8x8xf32> -> vector<1x8x8xf32>
    "tpu.trace_stop"() : () -> ()
    %cst_36 = arith.constant dense<0xFF800000> : vector<1x8xf32>
    %133 = vector.multi_reduction <maximumf>, %132, %cst_36 [2] : vector<1x8x8xf32> to vector<1x8xf32>
    %134 = vector.shape_cast %133 : vector<1x8xf32> to vector<1x8x1xf32>
    %135 = vector.broadcast %134 : vector<1x8x1xf32> to vector<1x8x8xf32>
    %136 = arith.subf %132, %135 : vector<1x8x8xf32>
    %137 = math.exp %136 : vector<1x8x8xf32>
    %cst_37 = arith.constant dense<0.000000e+00> : vector<1x8xf32>
    %138 = vector.multi_reduction <add>, %137, %cst_37 [2] : vector<1x8x8xf32> to vector<1x8xf32>
    %139 = vector.shape_cast %138 : vector<1x8xf32> to vector<1x8x1xf32>
    %140 = tpu.reciprocal %139 {approx = true} : vector<1x8x1xf32> -> vector<1x8x1xf32>
    %141 = vector.broadcast %140 : vector<1x8x1xf32> to vector<1x8x8xf32>
    %142 = arith.mulf %137, %141 : vector<1x8x8xf32>
    %143 = arith.truncf %142 : vector<1x8x8xf32> to vector<1x8x8xbf16>
    %144 = vector.extract_strided_slice %17 {offsets = [0, 0, 112], sizes = [1, 8, 16], strides = [1, 1, 1]} : vector<1x8x128xbf16> to vector<1x8x16xbf16>
    "tpu.trace_start"() <{level = 10 : i32, message = "bls,bse->ble"}> : () -> ()
    %cst_38 = arith.constant dense<0.000000e+00> : vector<1x8x16xf32>
    %145 = tpu.matmul %143, %144, %cst_38 {dimension_numbers = #tpu.dot_dimension_numbers<[2], [1], [1], [2], [0, 0, 0, 1, 1, 2], [0], [0]>} : vector<1x8x8xbf16>, vector<1x8x16xbf16>, vector<1x8x16xf32> -> vector<1x8x16xf32>
    "tpu.trace_stop"() : () -> ()
    %146 = tpu.concatenate %33, %49, %65, %81, %97, %113, %129, %145 in 2 : vector<1x8x16xf32>, vector<1x8x16xf32>, vector<1x8x16xf32>, vector<1x8x16xf32>, vector<1x8x16xf32>, vector<1x8x16xf32>, vector<1x8x16xf32>, vector<1x8x16xf32> -> vector<1x8x128xf32>
    %147 = vector.shape_cast %146 : vector<1x8x128xf32> to vector<8x128xf32>
    %148 = arith.truncf %147 : vector<8x128xf32> to vector<8x128xbf16>
    %149 = tpu.concatenate %30, %46, %62, %78, %94, %110, %126, %142 in 1 : vector<1x8x8xf32>, vector<1x8x8xf32>, vector<1x8x8xf32>, vector<1x8x8xf32>, vector<1x8x8xf32>, vector<1x8x8xf32>, vector<1x8x8xf32>, vector<1x8x8xf32> -> vector<1x64x8xf32>
    %150 = arith.truncf %149 : vector<1x64x8xf32> to vector<1x64x8xbf16>
    %c0_39 = arith.constant 0 : index
    %c0_40 = arith.constant 0 : index
    %c0_41 = arith.constant 0 : index
    %151 = vector.load %arg9[%c0_39, %c0_40, %c0_41] : memref<1x64x8xbf16, #tpu.memory_space<vmem>>, vector<1x64x8xbf16>
    tpu.vector_store %arg9[%c0_39, %c0_40, %c0_41], %150 {strides = array<i32>} : memref<1x64x8xbf16, #tpu.memory_space<vmem>>, vector<1x64x8xbf16>,
    %c0_42 = arith.constant 0 : index
    %c0_43 = arith.constant 0 : index
    %152 = vector.load %arg4[%c0_42, %c0_43] : memref<128x128xbf16, #tpu.memory_space<vmem>>, vector<128x128xbf16>
    %c0_44 = arith.constant 0 : index
    %c0_45 = arith.constant 0 : index
    %153 = vector.load %arg5[%c0_44, %c0_45] : memref<1x128xf32, #tpu.memory_space<vmem>>, vector<1x128xf32>
    %c0_46 = arith.constant 0 : index
    %c0_47 = arith.constant 0 : index
    %154 = vector.load %arg6[%c0_46, %c0_47] : memref<1x128xf32, #tpu.memory_space<vmem>>, vector<1x128xf32>
    %c0_48 = arith.constant 0 : index
    %c0_49 = arith.constant 0 : index
    %155 = vector.load %arg7[%c0_48, %c0_49] : memref<1x128xf32, #tpu.memory_space<vmem>>, vector<1x128xf32>
    %cst_50 = arith.constant dense<0.000000e+00> : vector<8x128xf32>
    %156 = tpu.matmul %148, %152, %cst_50 {dimension_numbers = #tpu.dot_dimension_numbers<[1], [0], [0], [1], [0, 0, 1, 1], [], []>} : vector<8x128xbf16>, vector<128x128xbf16>, vector<8x128xf32> -> vector<8x128xf32>
    %157 = vector.broadcast %153 : vector<1x128xf32> to vector<8x128xf32>
    %158 = arith.addf %156, %157 : vector<8x128xf32>
    %159 = arith.extf %1 : vector<8x128xbf16> to vector<8x128xf32>
    %160 = arith.addf %159, %158 : vector<8x128xf32>
    %cst_51 = arith.constant dense<0.000000e+00> : vector<8xf32>
    %161 = vector.multi_reduction <add>, %160, %cst_51 [1] : vector<8x128xf32> to vector<8xf32>
    %162 = vector.shape_cast %161 : vector<8xf32> to vector<8x1xf32>
    %cst_52 = arith.constant 1.280000e+02 : f32
    %163 = vector.broadcast %cst_52 : f32 to vector<8x1xf32>
    %164 = arith.divf %162, %163 : vector<8x1xf32>
    %165 = vector.broadcast %164 : vector<8x1xf32> to vector<8x128xf32>
    %166 = arith.subf %160, %165 : vector<8x128xf32>
    %167 = arith.mulf %166, %166 : vector<8x128xf32>
    %cst_53 = arith.constant dense<0.000000e+00> : vector<8xf32>
    %168 = vector.multi_reduction <add>, %167, %cst_53 [1] : vector<8x128xf32> to vector<8xf32>
    %169 = vector.shape_cast %168 : vector<8xf32> to vector<8x1xf32>
    %cst_54 = arith.constant 1.280000e+02 : f32
    %170 = vector.broadcast %cst_54 : f32 to vector<8x1xf32>
    %171 = arith.divf %169, %170 : vector<8x1xf32>
    %172 = vector.broadcast %164 : vector<8x1xf32> to vector<8x128xf32>
    %173 = arith.subf %160, %172 : vector<8x128xf32>
    %cst_55 = arith.constant 9.99999974E-6 : f32
    %174 = vector.broadcast %cst_55 : f32 to vector<8x1xf32>
    %175 = arith.addf %171, %174 : vector<8x1xf32>
    %176 = math.rsqrt %175 : vector<8x1xf32>
    %177 = vector.broadcast %176 : vector<8x1xf32> to vector<8x128xf32>
    %178 = arith.mulf %173, %177 : vector<8x128xf32>
    %179 = vector.broadcast %154 : vector<1x128xf32> to vector<8x128xf32>
    %180 = arith.mulf %178, %179 : vector<8x128xf32>
    %181 = vector.broadcast %155 : vector<1x128xf32> to vector<8x128xf32>
    %182 = arith.addf %180, %181 : vector<8x128xf32>
    %183 = vector.shape_cast %182 : vector<8x128xf32> to vector<1x8x128xf32>
    %184 = arith.truncf %183 : vector<1x8x128xf32> to vector<1x8x128xbf16>
    %c0_56 = arith.constant 0 : index
    %c0_57 = arith.constant 0 : index
    %c0_58 = arith.constant 0 : index
    %185 = vector.load %arg8[%c0_56, %c0_57, %c0_58] : memref<1x8x128xbf16, #tpu.memory_space<vmem>>, vector<1x8x128xbf16>
    tpu.vector_store %arg8[%c0_56, %c0_57, %c0_58], %184 {strides = array<i32>} : memref<1x8x128xbf16, #tpu.memory_space<vmem>>, vector<1x8x128xbf16>,
    return
  }
  func.func @transform_0(%arg0: i32) -> (i32, i32, i32) {
    %c0_i32 = arith.constant 0 : i32
    %c0_i32_0 = arith.constant 0 : i32
    %c0_i32_1 = arith.constant 0 : i32
    return %arg0, %c0_i32, %c0_i32_0 : i32, i32, i32
  }
  func.func @transform_1(%arg0: i32) -> (i32, i32) {
    %c0_i32 = arith.constant 0 : i32
    %c0_i32_0 = arith.constant 0 : i32
    %c0_i32_1 = arith.constant 0 : i32
    return %c0_i32, %c0_i32_0 : i32, i32
  }
  func.func @transform_2(%arg0: i32) -> (i32, i32) {
    %c0_i32 = arith.constant 0 : i32
    %c0_i32_0 = arith.constant 0 : i32
    %c0_i32_1 = arith.constant 0 : i32
    return %c0_i32, %c0_i32_0 : i32, i32
  }
  func.func @transform_3(%arg0: i32) -> (i32, i32) {
    %c0_i32 = arith.constant 0 : i32
    %c0_i32_0 = arith.constant 0 : i32
    %c0_i32_1 = arith.constant 0 : i32
    return %c0_i32, %c0_i32_0 : i32, i32
  }
  func.func @transform_4(%arg0: i32) -> (i32, i32) {
    %c0_i32 = arith.constant 0 : i32
    %c0_i32_0 = arith.constant 0 : i32
    %c0_i32_1 = arith.constant 0 : i32
    return %c0_i32, %c0_i32_0 : i32, i32
  }
  func.func @transform_5(%arg0: i32) -> (i32, i32) {
    %c0_i32 = arith.constant 0 : i32
    %c0_i32_0 = arith.constant 0 : i32
    %c0_i32_1 = arith.constant 0 : i32
    return %c0_i32, %c0_i32_0 : i32, i32
  }
  func.func @transform_6(%arg0: i32) -> (i32, i32) {
    %c0_i32 = arith.constant 0 : i32
    %c0_i32_0 = arith.constant 0 : i32
    %c0_i32_1 = arith.constant 0 : i32
    return %c0_i32, %c0_i32_0 : i32, i32
  }
  func.func @transform_7(%arg0: i32) -> (i32, i32, i32) {
    %c0_i32 = arith.constant 0 : i32
    %c0_i32_0 = arith.constant 0 : i32
    %c0_i32_1 = arith.constant 0 : i32
    return %arg0, %c0_i32, %c0_i32_0 : i32, i32, i32
  }
  func.func @transform_8(%arg0: i32) -> (i32, i32, i32) {
    %c0_i32 = arith.constant 0 : i32
    %c0_i32_0 = arith.constant 0 : i32
    %c0_i32_1 = arith.constant 0 : i32
    return %arg0, %c0_i32, %c0_i32_0 : i32, i32, i32
  }
}

</mosaic_0001>

<llo_original>
// kernel: tpu_custom_call.1
$region0: #{tpu_custom_call.1}
  #allocation0 [shape = 'u32[]', space=smem, size = 0x4, offset = 0x4, fixed_abs, tag = 'smem constant byte address 0x4 - core index']
  #allocation1 [shape = 'u32[144,128]{1,0:T(1,128)}', space=vmem, size = 0x12000, scoped, tag = 'internal scratch']
  %s0 = inlined_call_operand.hbm [shape: bf16[2,8,128], index: 0, kind: input, shape index: {}]
  %s1 = inlined_call_operand.hbm [shape: bf16[128,384], index: 1, kind: input, shape index: {}]
  %s2 = inlined_call_operand.vmem [shape: f32[1,384], index: 2, kind: input, shape index: {}]
  %s3 = inlined_call_operand.hbm [shape: bf16[128,128], index: 3, kind: input, shape index: {}]
  %s4 = inlined_call_operand.vmem [shape: f32[1,128], index: 4, kind: input, shape index: {}]
  %s5 = inlined_call_operand.vmem [shape: f32[1,128], index: 5, kind: input, shape index: {}]
  %s6 = inlined_call_operand.vmem [shape: f32[1,128], index: 6, kind: input, shape index: {}]
  %s7 = inlined_call_operand.hbm [shape: bf16[2,8,128], index: 7, kind: output, shape index: {0}]
  %s8 = inlined_call_operand.vmem [shape: bf16[2,64,8], index: 8, kind: output, shape index: {1}]
  %9 = xla_tuple %s7, %s8
  %s10 = sld [smem:[#allocation0]]
  $region81: #{tpu_custom_call.1} parent=0
    _
  %s12 = ssub.s32 1, %s10
  %s13 = scalar_select 0, %s12, %s10
  $region1: #{tpu_custom_call.1} parent=0
    #allocation2 [shape = 'u8[4096]{0}', space=vmem, size = 0x1000, scoped, tag = 'input window, operand 0']
    #allocation3 [shape = 's32[2]{0}', space=sflag, size = 0x8, scoped, tag = 'scoped memory for tpu_custom_call.1']
    #allocation4 [shape = 's32[2]{0}', space=sflag, size = 0x8, scoped, tag = 'scoped memory for tpu_custom_call.1']
    #allocation5 [shape = 'u8[98304]{0}', space=vmem, size = 0x18000, scoped, tag = 'input window, operand 1, single buffered']
    #allocation6 [shape = 's32[1]{0}', space=sflag, size = 0x4, scoped, tag = 'scoped memory for tpu_custom_call.1']
    #allocation7 [shape = 'u8[32768]{0}', space=vmem, size = 0x8000, scoped, tag = 'input window, operand 3, single buffered']
    #allocation8 [shape = 'u8[4096]{0}', space=vmem, size = 0x1000, scoped, tag = 'output window, operand 0']
    %14 = vsyncpa [#allocation3], 0
    %s15 = scalar_lea.sflag [#allocation3], 1
    %16 = vsyncpa %s15, 0
    %17 = vsyncpa [#allocation6], 0
    %18 = vsyncpa [#allocation4], 0
    %s19 = scalar_lea.sflag [#allocation4], 1
    %20 = vsyncpa %s19, 0
    loop: start=0, step=1, limit=4
    $region2: #{tpu_custom_call.1} parent=1 // loop_pre_header
      _
    $region3: #{tpu_custom_call.1} parent=1 // loop_header
      %s22 = sphi 0, %s26
      %p23 = scmp.ge.s32.totalorder %s22, 4
      %s32 = sphi 0, %s34
      %s35 = sphi 0, %s32
      %s36 = sphi 0, %s35
      %s52 = sphi 0, %s36
      %s56 = sphi 0, %s56
      %s58 = sphi 0, %s56
      %s59 = sphi 0, %s58
      %s73 = sphi 0, %s59
      %s77 = sphi 0, %s77
      %s79 = sphi 0, %s77
      %s80 = sphi 0, %s79
      %s94 = sphi 0, %s80
      %s98 = sphi 0, %s98
      %s100 = sphi 0, %s98
      %s101 = sphi 0, %s100
      %s115 = sphi 0, %s101
      %s119 = sphi 0, %s119
      %s121 = sphi 0, %s119
      %s122 = sphi 0, %s121
      %s136 = sphi 0, %s122
      %s140 = sphi 0, %s140
      %s142 = sphi 0, %s140
      %s143 = sphi 0, %s142
      %s157 = sphi 0, %s143
      %s161 = sphi 0, %s161
      %s163 = sphi 0, %s161
      %s164 = sphi 0, %s163
      %s178 = sphi 0, %s164
      %s184 = sphi 0, %s186
      %s187 = sphi 0, %s184
      %s188 = sphi 0, %s187
      %s204 = sphi 0, %s188
      %s210 = sphi 0, %s212
      %s213 = sphi 0, %s210
      %s214 = sphi 0, %s213
      %s230 = sphi 0, %s214
    $region4: #{tpu_custom_call.1} parent=1 // loop_header_branch
      %25 = sbr.rel (%p23) target = $region8
    $region5: #{tpu_custom_call.1} parent=1 // loop_body
      %s27 = ssub.s32 %s22, 1
      %s28 = ssub.s32 %s22, 2
      %s29 = sadd.s32 %s22, 1
      %s30 = ssub.s32 %s22, %s29
      %p31 = scmp.eq.s32.totalorder %s30, 0
      %s33 = sadd.s32 %s32, 1
      %s34 = scalar_select %p31, %s32, %s33
      %p37 = pneg %p31
      %p38 = scmp.eq.s32.totalorder %s22, 1
      %p39 = por %p37, %p38
      %p40 = scmp.ne.s32.totalorder %s32, %s35
      %p41 = scmp.eq.s32.totalorder %s22, 0
      %p42 = por %p40, %p41
      %p43 = scmp.ne.s32.totalorder %s32, %s35
      %p44 = scmp.eq.s32.totalorder %s27, 1
      %p45 = por %p43, %p44
      %p46 = scmp.ne.s32.totalorder %s35, %s36
      %p47 = scmp.eq.s32.totalorder %s27, 0
      %p48 = por %p46, %p47
      %p49 = scmp.ne.s32.totalorder %s35, %s36
      %p50 = scmp.eq.s32.totalorder %s28, 1
      %p51 = por %p49, %p50
      %p53 = scmp.ne.s32.totalorder %s36, %s52
      %p54 = scmp.eq.s32.totalorder %s28, 0
      %p55 = por %p53, %p54
      %s57 = sadd.s32 %s56, 1
      %p60 = scmp.eq.s32.totalorder %s22, 1
      %p61 = scmp.ne.s32.totalorder %s56, %s58
      %p62 = scmp.eq.s32.totalorder %s22, 0
      %p63 = por %p61, %p62
      %p64 = scmp.ne.s32.totalorder %s56, %s58
      %p65 = scmp.eq.s32.totalorder %s27, 1
      %p66 = por %p64, %p65
      %p67 = scmp.ne.s32.totalorder %s58, %s59
      %p68 = scmp.eq.s32.totalorder %s27, 0
      %p69 = por %p67, %p68
      %p70 = scmp.ne.s32.totalorder %s58, %s59
      %p71 = scmp.eq.s32.totalorder %s28, 1
      %p72 = por %p70, %p71
      %p74 = scmp.ne.s32.totalorder %s59, %s73
      %p75 = scmp.eq.s32.totalorder %s28, 0
      %p76 = por %p74, %p75
      %s78 = sadd.s32 %s77, 1
      %p81 = scmp.eq.s32.totalorder %s22, 1
      %p82 = scmp.ne.s32.totalorder %s77, %s79
      %p83 = scmp.eq.s32.totalorder %s22, 0
      %p84 = por %p82, %p83
      %p85 = scmp.ne.s32.totalorder %s77, %s79
      %p86 = scmp.eq.s32.totalorder %s27, 1
      %p87 = por %p85, %p86
      %p88 = scmp.ne.s32.totalorder %s79, %s80
      %p89 = scmp.eq.s32.totalorder %s27, 0
      %p90 = por %p88, %p89
      %p91 = scmp.ne.s32.totalorder %s79, %s80
      %p92 = scmp.eq.s32.totalorder %s28, 1
      %p93 = por %p91, %p92
      %p95 = scmp.ne.s32.totalorder %s80, %s94
      %p96 = scmp.eq.s32.totalorder %s28, 0
      %p97 = por %p95, %p96
      %s99 = sadd.s32 %s98, 1
      %p102 = scmp.eq.s32.totalorder %s22, 1
      %p103 = scmp.ne.s32.totalorder %s98, %s100
      %p104 = scmp.eq.s32.totalorder %s22, 0
      %p105 = por %p103, %p104
      %p106 = scmp.ne.s32.totalorder %s98, %s100
      %p107 = scmp.eq.s32.totalorder %s27, 1
      %p108 = por %p106, %p107
      %p109 = scmp.ne.s32.totalorder %s100, %s101
      %p110 = scmp.eq.s32.totalorder %s27, 0
      %p111 = por %p109, %p110
      %p112 = scmp.ne.s32.totalorder %s100, %s101
      %p113 = scmp.eq.s32.totalorder %s28, 1
      %p114 = por %p112, %p113
      %p116 = scmp.ne.s32.totalorder %s101, %s115
      %p117 = scmp.eq.s32.totalorder %s28, 0
      %p118 = por %p116, %p117
      %s120 = sadd.s32 %s119, 1
      %p123 = scmp.eq.s32.totalorder %s22, 1
      %p124 = scmp.ne.s32.totalorder %s119, %s121
      %p125 = scmp.eq.s32.totalorder %s22, 0
      %p126 = por %p124, %p125
      %p127 = scmp.ne.s32.totalorder %s119, %s121
      %p128 = scmp.eq.s32.totalorder %s27, 1
      %p129 = por %p127, %p128
      %p130 = scmp.ne.s32.totalorder %s121, %s122
      %p131 = scmp.eq.s32.totalorder %s27, 0
      %p132 = por %p130, %p131
      %p133 = scmp.ne.s32.totalorder %s121, %s122
      %p134 = scmp.eq.s32.totalorder %s28, 1
      %p135 = por %p133, %p134
      %p137 = scmp.ne.s32.totalorder %s122, %s136
      %p138 = scmp.eq.s32.totalorder %s28, 0
      %p139 = por %p137, %p138
      %s141 = sadd.s32 %s140, 1
      %p144 = scmp.eq.s32.totalorder %s22, 1
      %p145 = scmp.ne.s32.totalorder %s140, %s142
      %p146 = scmp.eq.s32.totalorder %s22, 0
      %p147 = por %p145, %p146
      %p148 = scmp.ne.s32.totalorder %s140, %s142
      %p149 = scmp.eq.s32.totalorder %s27, 1
      %p150 = por %p148, %p149
      %p151 = scmp.ne.s32.totalorder %s142, %s143
      %p152 = scmp.eq.s32.totalorder %s27, 0
      %p153 = por %p151, %p152
      %p154 = scmp.ne.s32.totalorder %s142, %s143
      %p155 = scmp.eq.s32.totalorder %s28, 1
      %p156 = por %p154, %p155
      %p158 = scmp.ne.s32.totalorder %s143, %s157
      %p159 = scmp.eq.s32.totalorder %s28, 0
      %p160 = por %p158, %p159
      %s162 = sadd.s32 %s161, 1
      %p165 = scmp.eq.s32.totalorder %s22, 1
      %p166 = scmp.ne.s32.totalorder %s161, %s163
      %p167 = scmp.eq.s32.totalorder %s22, 0
      %p168 = por %p166, %p167
      %p169 = scmp.ne.s32.totalorder %s161, %s163
      %p170 = scmp.eq.s32.totalorder %s27, 1
      %p171 = por %p169, %p170
      %p172 = scmp.ne.s32.totalorder %s163, %s164
      %p173 = scmp.eq.s32.totalorder %s27, 0
      %p174 = por %p172, %p173
      %p175 = scmp.ne.s32.totalorder %s163, %s164
      %p176 = scmp.eq.s32.totalorder %s28, 1
      %p177 = por %p175, %p176
      %p179 = scmp.ne.s32.totalorder %s164, %s178
      %p180 = scmp.eq.s32.totalorder %s28, 0
      %p181 = por %p179, %p180
      %s182 = ssub.s32 %s22, %s29
      %p183 = scmp.eq.s32.totalorder %s182, 0
      %s185 = sadd.s32 %s184, 1
      %s186 = scalar_select %p183, %s184, %s185
      %p189 = pneg %p183
      %p190 = scmp.eq.s32.totalorder %s22, 1
      %p191 = por %p189, %p190
      %p192 = scmp.ne.s32.totalorder %s184, %s187
      %p193 = scmp.eq.s32.totalorder %s22, 0
      %p194 = por %p192, %p193
      %p195 = scmp.ne.s32.totalorder %s184, %s187
      %p196 = scmp.eq.s32.totalorder %s27, 1
      %p197 = por %p195, %p196
      %p198 = scmp.ne.s32.totalorder %s187, %s188
      %p199 = scmp.eq.s32.totalorder %s27, 0
      %p200 = por %p198, %p199
      %p201 = scmp.ne.s32.totalorder %s187, %s188
      %p202 = scmp.eq.s32.totalorder %s28, 1
      %p203 = por %p201, %p202
      %p205 = scmp.ne.s32.totalorder %s188, %s204
      %p206 = scmp.eq.s32.totalorder %s28, 0
      %p207 = por %p205, %p206
      %s208 = ssub.s32 %s22, %s29
      %p209 = scmp.eq.s32.totalorder %s208, 0
      %s211 = sadd.s32 %s210, 1
      %s212 = scalar_select %p209, %s210, %s211
      %p215 = pneg %p209
      %p216 = scmp.eq.s32.totalorder %s22, 1
      %p217 = por %p215, %p216
      %p218 = scmp.ne.s32.totalorder %s210, %s213
      %p219 = scmp.eq.s32.totalorder %s22, 0
      %p220 = por %p218, %p219
      %p221 = scmp.ne.s32.totalorder %s210, %s213
      %p222 = scmp.eq.s32.totalorder %s27, 1
      %p223 = por %p221, %p222
      %p224 = scmp.ne.s32.totalorder %s213, %s214
      %p225 = scmp.eq.s32.totalorder %s27, 0
      %p226 = por %p224, %p225
      %p227 = scmp.ne.s32.totalorder %s213, %s214
      %p228 = scmp.eq.s32.totalorder %s28, 1
      %p229 = por %p227, %p228
      %p231 = scmp.ne.s32.totalorder %s214, %s230
      %p232 = scmp.eq.s32.totalorder %s28, 0
      %p233 = por %p231, %p232
      %p234 = scmp.le.s32.totalorder 1, %s22
      %p235 = scmp.lt.s32.totalorder %s22, 3
      %p236 = pnand %p234, %p235
      %p237 = pneg %p236
      // Predicated region
      $region9: #{tpu_custom_call.1} parent=5 // pred_check
        _
      $region10: #{tpu_custom_call.1} parent=5 // pred_check_branch
        %239 = sbr.rel (%p236) target = $region12
      $region11: #{tpu_custom_call.1} parent=5 // pred_region
        %s240 = ssub.s32 %s22, 1
        // Predicated region
        $region13: #{tpu_custom_call.1} parent=11 // pred_check
          %p241 = pneg %p69
        $region14: #{tpu_custom_call.1} parent=11 // pred_check_branch
          %243 = sbr.rel (%p241) target = $region16
        $region15: #{tpu_custom_call.1} parent=11 // pred_region
          %s245 = ssub.s32 3072, 3072
          %246 = vsyncadd [#allocation6], %s245
          %s247 = sshll.u32 [#allocation5], 4
          %s248 = int_to_ptr.vmem [resolvable:$true] %s247
          %253 = dma.hbm_to_vmem [thread:$0]  %s1, 3072, %s248, [#allocation6], 192, 192, 12
        $region16: #{tpu_custom_call.1} parent=11 // pred_fallthru
          _
        // Predicated region
        $region17: #{tpu_custom_call.1} parent=11 // pred_check
          %p254 = pneg %p90
        $region18: #{tpu_custom_call.1} parent=11 // pred_check_branch
          %256 = sbr.rel (%p254) target = $region20
        $region19: #{tpu_custom_call.1} parent=11 // pred_region
          _
        $region20: #{tpu_custom_call.1} parent=11 // pred_fallthru
          _
        // Predicated region
        $region21: #{tpu_custom_call.1} parent=11 // pred_check
          %p257 = pneg %p111
        $region22: #{tpu_custom_call.1} parent=11 // pred_check_branch
          %259 = sbr.rel (%p257) target = $region24
        $region23: #{tpu_custom_call.1} parent=11 // pred_region
          %s261 = ssub.s32 1024, 1024
          %262 = vsyncadd [#allocation6], %s261
          %s263 = sshll.u32 [#allocation7], 4
          %s264 = int_to_ptr.vmem [resolvable:$true] %s263
          %269 = dma.hbm_to_vmem [thread:$0]  %s3, 1024, %s264, [#allocation6], 64, 64, 4
        $region24: #{tpu_custom_call.1} parent=11 // pred_fallthru
          _
        // Predicated region
        $region25: #{tpu_custom_call.1} parent=11 // pred_check
          %p270 = pneg %p132
        $region26: #{tpu_custom_call.1} parent=11 // pred_check_branch
          %272 = sbr.rel (%p270) target = $region28
        $region27: #{tpu_custom_call.1} parent=11 // pred_region
          _
        $region28: #{tpu_custom_call.1} parent=11 // pred_fallthru
          _
        // Predicated region
        $region29: #{tpu_custom_call.1} parent=11 // pred_check
          %p273 = pneg %p153
        $region30: #{tpu_custom_call.1} parent=11 // pred_check_branch
          %275 = sbr.rel (%p273) target = $region32
        $region31: #{tpu_custom_call.1} parent=11 // pred_region
          _
        $region32: #{tpu_custom_call.1} parent=11 // pred_fallthru
          _
        // Predicated region
        $region33: #{tpu_custom_call.1} parent=11 // pred_check
          %p276 = pneg %p174
        $region34: #{tpu_custom_call.1} parent=11 // pred_check_branch
          %278 = sbr.rel (%p276) target = $region36
        $region35: #{tpu_custom_call.1} parent=11 // pred_region
          _
        $region36: #{tpu_custom_call.1} parent=11 // pred_fallthru
          _
      $region12: #{tpu_custom_call.1} parent=5 // pred_fallthru
        _
      %p279 = scmp.lt.s32.totalorder %s22, 2
      // Predicated region
      $region37: #{tpu_custom_call.1} parent=5 // pred_check
        %p280 = pneg %p279
      $region38: #{tpu_custom_call.1} parent=5 // pred_check_branch
        %282 = sbr.rel (%p280) target = $region40
      $region39: #{tpu_custom_call.1} parent=5 // pred_region
        // Predicated region
        $region41: #{tpu_custom_call.1} parent=39 // pred_check
          %p283 = pneg %p42
        $region42: #{tpu_custom_call.1} parent=39 // pred_check_branch
          %285 = sbr.rel (%p283) target = $region44
        $region43: #{tpu_custom_call.1} parent=39 // pred_region
          %s286 = sand.u32 %s32, 1
          %s287 = scalar_lea.sflag [#allocation3], %s286
          %s288 = sand.u32 %s32, 1
          %s289 = smul.addr %s288, 4
          %s290 = scalar_lea.vmem [#allocation2], %s289
          %s292 = ssub.s32 64, 64
          %293 = vsyncadd %s287, %s292
          %s294 = smul.addr %s22, 64
          %s295 = scalar_lea.hbm %s0, %s294
          %s297 = sshll.u32 %s290, 4
          %s298 = int_to_ptr.vmem [resolvable:$true] %s297
          %300 = dma.hbm_to_vmem [thread:$0]  %s295, 64, %s298, %s287
        $region44: #{tpu_custom_call.1} parent=39 // pred_fallthru
          _
      $region40: #{tpu_custom_call.1} parent=5 // pred_fallthru
        _
      %p301 = scmp.le.s32.totalorder 1, %s22
      %p302 = scmp.lt.s32.totalorder %s22, 3
      %p303 = pnand %p301, %p302
      %p304 = pneg %p303
      // Predicated region
      $region45: #{tpu_custom_call.1} parent=5 // pred_check
        _
      $region46: #{tpu_custom_call.1} parent=5 // pred_check_branch
        %306 = sbr.rel (%p303) target = $region48
      $region47: #{tpu_custom_call.1} parent=5 // pred_region
        %s307 = ssub.s32 %s22, 1
        %s308 = sand.u32 %s35, 1
        %s309 = scalar_lea.sflag [#allocation3], %s308
        %s310 = sand.u32 %s35, 1
        %s311 = smul.addr %s310, 4
        %s312 = scalar_lea.vmem [#allocation2], %s311
        // Predicated region
        $region49: #{tpu_custom_call.1} parent=47 // pred_check
          %p313 = pneg %p48
        $region50: #{tpu_custom_call.1} parent=47 // pred_check_branch
          %315 = sbr.rel (%p313) target = $region52
        $region51: #{tpu_custom_call.1} parent=47 // pred_region
          %316 = dma.done %s309, 64
        $region52: #{tpu_custom_call.1} parent=47 // pred_fallthru
          _
        // Predicated region
        $region53: #{tpu_custom_call.1} parent=47 // pred_check
          %p317 = pneg %p69
        $region54: #{tpu_custom_call.1} parent=47 // pred_check_branch
          %319 = sbr.rel (%p317) target = $region56
        $region55: #{tpu_custom_call.1} parent=47 // pred_region
          %320 = dma.done [#allocation6], 3072
        $region56: #{tpu_custom_call.1} parent=47 // pred_fallthru
          _
        // Predicated region
        $region57: #{tpu_custom_call.1} parent=47 // pred_check
          %p321 = pneg %p111
        $region58: #{tpu_custom_call.1} parent=47 // pred_check_branch
          %323 = sbr.rel (%p321) target = $region60
        $region59: #{tpu_custom_call.1} parent=47 // pred_region
          %324 = dma.done [#allocation6], 1024
        $region60: #{tpu_custom_call.1} parent=47 // pred_fallthru
          _
        %s325 = sand.u32 %s35, 1
        %s326 = scalar_lea.sflag [#allocation3], %s325
        %s327 = sand.u32 %s35, 1
        %s328 = smul.addr %s327, 4
        %s329 = scalar_lea.vmem [#allocation2], %s328
        %p330 = pneg %p48
        %p331 = pneg %p45
        %p332 = pneg %p69
        %p333 = pneg %p66
        %p334 = pneg %p90
        %p335 = pneg %p87
        %p336 = pneg %p111
        %p337 = pneg %p108
        %p338 = pneg %p132
        %p339 = pneg %p129
        %p340 = pneg %p153
        %p341 = pneg %p150
        %p342 = pneg %p174
        %p343 = pneg %p171
        %p344 = pneg %p200
        %p345 = pneg %p197
        %s346 = sand.u32 %s187, 1
        %s347 = scalar_lea.sflag [#allocation4], %s346
        %s348 = sand.u32 %s187, 1
        %s349 = smul.addr %s348, 4
        %s350 = scalar_lea.vmem [#allocation8], %s349
        %p351 = pneg %p226
        %p352 = pneg %p223
        %p353 = scmp.lt.s32.totalorder %s27, 1
        %s354 = scalar_select %p353, %s27, 1
        %s355 = smul.addr %s354, 8
        %s356 = smul.addr %s355, 4
        %s357 = scalar_lea.vmem %s8, %s356
        %p358 = scmp.lt.s32.totalorder %s27, 1
        %s359 = scalar_select %p358, %s27, 1
        %s360 = smul.addr %s359, 8
        %s361 = smul.addr %s360, 4
        %s362 = scalar_lea.vmem %s8, %s361
        %v364 = vld [vmem:[%s312] sm:$0xf]
        %v365 = vld [vmem:[#allocation5] sm:$0xff]
        %v366 = vld [vmem:[#allocation5 + $0x8] sm:$0xf]
        %v367 = vld [vmem:[#allocation5 + $0xc] sm:$0xff]
        %v368 = vld [vmem:[#allocation5 + $0x14] sm:$0xf]
        %v369 = vld [vmem:[#allocation5 + $0x18] sm:$0xff]
        %v370 = vld [vmem:[#allocation5 + $0x20] sm:$0xf]
        %v371 = vld [vmem:[#allocation5 + $0x24] sm:$0xff]
        %v372 = vld [vmem:[#allocation5 + $0x2c] sm:$0xf]
        %v373 = vld [vmem:[#allocation5 + $0x30] sm:$0xff]
        %v374 = vld [vmem:[#allocation5 + $0x38] sm:$0xf]
        %v375 = vld [vmem:[#allocation5 + $0x3c] sm:$0xff]
        %v376 = vld [vmem:[#allocation5 + $0x44] sm:$0xf]
        %v377 = vld [vmem:[#allocation5 + $0x48] sm:$0xff]
        %v378 = vld [vmem:[#allocation5 + $0x50] sm:$0xf]
        %v379 = vld [vmem:[#allocation5 + $0x54] sm:$0xff]
        %v380 = vld [vmem:[#allocation5 + $0x5c] sm:$0xf]
        %v381 = vld [vmem:[#allocation5 + $0x60] sm:$0xff]
        %v382 = vld [vmem:[#allocation5 + $0x68] sm:$0xf]
        %v383 = vld [vmem:[#allocation5 + $0x6c] sm:$0xff]
        %v384 = vld [vmem:[#allocation5 + $0x74] sm:$0xf]
        %v385 = vld [vmem:[#allocation5 + $0x78] sm:$0xff]
        %v386 = vld [vmem:[#allocation5 + $0x80] sm:$0xf]
        %v387 = vld [vmem:[#allocation5 + $0x84] sm:$0xff]
        %v388 = vld [vmem:[#allocation5 + $0x8c] sm:$0xf]
        %v389 = vld [vmem:[#allocation5 + $0x90] sm:$0xff]
        %v390 = vld [vmem:[#allocation5 + $0x98] sm:$0xf]
        %v391 = vld [vmem:[#allocation5 + $0x9c] sm:$0xff]
        %v392 = vld [vmem:[#allocation5 + $0xa4] sm:$0xf]
        %v393 = vld [vmem:[#allocation5 + $0xa8] sm:$0xff]
        %v394 = vld [vmem:[#allocation5 + $0xb0] sm:$0xf]
        %v395 = vld [vmem:[#allocation5 + $0xb4] sm:$0xff]
        %v396 = vld [vmem:[#allocation5 + $0xbc] sm:$0xf]
        %v397 = vld [vmem:[%s2] sm:$0x7]
        %v399 = vlaneseq
        %v400 = vshrl.u32 %v399, 7
        %v401 = vsub.s32 0, %v400
        %v402 = vrot.slane %v397, %v401
        %v403 = vlaneseq
        %v404 = vshrl.u32 %v403, 7
        %v405 = vsub.s32 1, %v404
        %v406 = vrot.slane %v397, %v405
        %v407 = vlaneseq
        %v408 = vshrl.u32 %v407, 7
        %v409 = vsub.s32 2, %v408
        %v410 = vrot.slane %v397, %v409
        %v446 = vunpack.c.l.b16 %v365
        %v447 = vunpack.c.h.b16 %v365
        %v448 = vunpack.c.l.b16 %v366
        %v449 = vunpack.c.l.b16 %v367
        %v450 = vunpack.c.h.b16 %v367
        %v451 = vunpack.c.l.b16 %v368
        %v452 = vunpack.c.l.b16 %v369
        %v453 = vunpack.c.h.b16 %v369
        %v454 = vunpack.c.l.b16 %v370
        %v455 = vunpack.c.l.b16 %v371
        %v456 = vunpack.c.h.b16 %v371
        %v457 = vunpack.c.l.b16 %v372
        %v458 = vunpack.c.l.b16 %v373
        %v459 = vunpack.c.h.b16 %v373
        %v460 = vunpack.c.l.b16 %v374
        %v461 = vunpack.c.l.b16 %v375
        %v462 = vunpack.c.h.b16 %v375
        %v463 = vunpack.c.l.b16 %v376
        %v464 = vunpack.c.l.b16 %v377
        %v465 = vunpack.c.h.b16 %v377
        %v466 = vunpack.c.l.b16 %v378
        %v467 = vunpack.c.l.b16 %v379
        %v468 = vunpack.c.h.b16 %v379
        %v469 = vunpack.c.l.b16 %v380
        %v470 = vunpack.c.l.b16 %v381
        %v471 = vunpack.c.h.b16 %v381
        %v472 = vunpack.c.l.b16 %v382
        %v473 = vunpack.c.l.b16 %v383
        %v474 = vunpack.c.h.b16 %v383
        %v475 = vunpack.c.l.b16 %v384
        %v476 = vunpack.c.l.b16 %v385
        %v477 = vunpack.c.h.b16 %v385
        %v478 = vunpack.c.l.b16 %v386
        %v479 = vunpack.c.l.b16 %v387
        %v480 = vunpack.c.h.b16 %v387
        %v481 = vunpack.c.l.b16 %v388
        %v482 = vunpack.c.l.b16 %v389
        %v483 = vunpack.c.h.b16 %v389
        %v484 = vunpack.c.l.b16 %v390
        %v485 = vunpack.c.l.b16 %v391
        %v486 = vunpack.c.h.b16 %v391
        %v487 = vunpack.c.l.b16 %v392
        %v488 = vunpack.c.l.b16 %v393
        %v489 = vunpack.c.h.b16 %v393
        %v490 = vunpack.c.l.b16 %v394
        %v491 = vunpack.c.l.b16 %v395
        %v492 = vunpack.c.h.b16 %v395
        %v493 = vunpack.c.l.b16 %v396
        %v494 = vpack.c.b16 %v449, %v446
        %v495 = vpack.c.b16 %v450, %v447
        %v496 = vpack.c.b16 %v451, %v448
        %v497 = vpack.c.b16 %v455, %v452
        %v498 = vpack.c.b16 %v456, %v453
        %v499 = vpack.c.b16 %v457, %v454
        %v500 = vpack.c.b16 %v461, %v458
        %v501 = vpack.c.b16 %v462, %v459
        %v502 = vpack.c.b16 %v463, %v460
        %v503 = vpack.c.b16 %v467, %v464
        %v504 = vpack.c.b16 %v468, %v465
        %v505 = vpack.c.b16 %v469, %v466
        %v506 = vpack.c.b16 %v473, %v470
        %v507 = vpack.c.b16 %v474, %v471
        %v508 = vpack.c.b16 %v475, %v472
        %v509 = vpack.c.b16 %v479, %v476
        %v510 = vpack.c.b16 %v480, %v477
        %v511 = vpack.c.b16 %v481, %v478
        %v512 = vpack.c.b16 %v485, %v482
        %v513 = vpack.c.b16 %v486, %v483
        %v514 = vpack.c.b16 %v487, %v484
        %v515 = vpack.c.b16 %v491, %v488
        %v516 = vpack.c.b16 %v492, %v489
        %v517 = vpack.c.b16 %v493, %v490
        %542 = vmatprep.subr.bf16.mxu0 %v495
        %543 = vmatpush1.bf16.msra.mxu0 %v494
        %544 = vmatprep.subr.bf16.mxu0 %v498
        %545 = vmatpush1.bf16.msra.mxu0 %v497
        %546 = vmatprep.subr.bf16.mxu0 %v501
        %547 = vmatpush1.bf16.msra.mxu0 %v500
        %548 = vmatprep.subr.bf16.mxu0 %v504
        %549 = vmatpush1.bf16.msra.mxu0 %v503
        %550 = vmatprep.subr.bf16.mxu0 %v507
        %551 = vmatpush1.bf16.msra.mxu0 %v506
        %552 = vmatprep.subr.bf16.mxu0 %v510
        %553 = vmatpush1.bf16.msra.mxu0 %v509
        %554 = vmatprep.subr.bf16.mxu0 %v513
        %555 = vmatpush1.bf16.msra.mxu0 %v512
        %556 = vmatprep.subr.bf16.mxu0 %v516
        %557 = vmatpush1.bf16.msra.mxu0 %v515
        %558 = vmatprep.subr.bf16.mxu0 0
        %559 = vmatpush1.bf16.msra.mxu0 0
        %560 = vmatprep.subr.bf16.mxu0 0
        %561 = vmatpush1.bf16.msra.mxu0 0
        %562 = vmatprep.subr.bf16.mxu0 0
        %563 = vmatpush1.bf16.msra.mxu0 0
        %564 = vmatprep.subr.bf16.mxu0 0
        %565 = vmatpush1.bf16.msra.mxu0 0
        %566 = vmatprep.subr.bf16.mxu0 0
        %567 = vmatpush1.bf16.msra.mxu0 0
        %568 = vmatprep.subr.bf16.mxu0 0
        %569 = vmatpush1.bf16.msra.mxu0 0
        %570 = vmatprep.subr.bf16.mxu0 0
        %571 = vmatpush1.bf16.msra.mxu0 0
        %572 = vmatprep.subr.bf16.mxu0 0
        %573 = vmatpush1.bf16.msra.mxu0 0
        %574 = vmatprep.mubr.bf16.mxu0 0
        %575 = vmatmul.mubr.bf16.gmra.mrb[0].mxu0 %v364
        %v576 = vpop.f32.mrb[0].mxu0
        %v577 = vadd.f32 %v402, %v576
        %v578 = vpop.f32.mrb[0].mxu0
        %v579 = vadd.f32 %v406, %v578
        %v580 = vpop.f32.mrb[0].mxu0
        %v581 = vpop.f32.mrb[0].mxu0
        %582 = vdwg.mxu0
        %583 = vmatprep.subr.bf16.mxu0 0
        %584 = vmatpush1.bf16.msra.mxu0 %v496
        %585 = vmatprep.subr.bf16.mxu0 0
        %586 = vmatpush1.bf16.msra.mxu0 %v499
        %587 = vmatprep.subr.bf16.mxu0 0
        %588 = vmatpush1.bf16.msra.mxu0 %v502
        %589 = vmatprep.subr.bf16.mxu0 0
        %590 = vmatpush1.bf16.msra.mxu0 %v505
        %591 = vmatprep.subr.bf16.mxu0 0
        %592 = vmatpush1.bf16.msra.mxu0 %v508
        %593 = vmatprep.subr.bf16.mxu0 0
        %594 = vmatpush1.bf16.msra.mxu0 %v511
        %595 = vmatprep.subr.bf16.mxu0 0
        %596 = vmatpush1.bf16.msra.mxu0 %v514
        %597 = vmatprep.subr.bf16.mxu0 0
        %598 = vmatpush1.bf16.msra.mxu0 %v517
        %599 = vmatprep.subr.bf16.mxu0 0
        %600 = vmatpush1.bf16.msra.mxu0 0
        %601 = vmatprep.subr.bf16.mxu0 0
        %602 = vmatpush1.bf16.msra.mxu0 0
        %603 = vmatprep.subr.bf16.mxu0 0
        %604 = vmatpush1.bf16.msra.mxu0 0
        %605 = vmatprep.subr.bf16.mxu0 0
        %606 = vmatpush1.bf16.msra.mxu0 0
        %607 = vmatprep.subr.bf16.mxu0 0
        %608 = vmatpush1.bf16.msra.mxu0 0
        %609 = vmatprep.subr.bf16.mxu0 0
        %610 = vmatpush1.bf16.msra.mxu0 0
        %611 = vmatprep.subr.bf16.mxu0 0
        %612 = vmatpush1.bf16.msra.mxu0 0
        %613 = vmatprep.subr.bf16.mxu0 0
        %614 = vmatpush1.bf16.msra.mxu0 0
        %615 = vmatprep.mubr.bf16.mxu0 0
        %616 = vmatmul.mubr.bf16.gmra.mrb[0].mxu0 %v364
        %v617 = vpop.f32.mrb[0].mxu0
        %v618 = vadd.f32 %v410, %v617
        %v619 = vpop.f32.mrb[0].mxu0
        %v620 = vpop.f32.mrb[0].mxu0
        %v621 = vpop.f32.mrb[0].mxu0
        %622 = vdwg.mxu0
        %v623 = vmul.f32 %v577, 0.25
        %v624 = vpack.c.bf16 %v623, %v623
        %v625 = vpack.c.bf16 %v579, %v579
        %v626 = vpack.c.bf16 %v618, %v618
        %vm627 = vcmask 130048
        %v629 = vsel %vm627, %v624, 0
        %v632 = vsel %vm627, %v625, 0
        %634 = vmatprep.subr.bf16.mxu0 0
        %635 = vmatpush1.bf16.xpose.msra.mxu0 %v632
        %636 = vmatprep.subr.bf16.mxu0 0
        %637 = vmatpush1.bf16.xpose.msra.mxu0 0
        %638 = vmatprep.subr.bf16.mxu0 0
        %639 = vmatpush1.bf16.xpose.msra.mxu0 0
        %640 = vmatprep.subr.bf16.mxu0 0
        %641 = vmatpush1.bf16.xpose.msra.mxu0 0
        %642 = vmatprep.subr.bf16.mxu0 0
        %643 = vmatpush1.bf16.xpose.msra.mxu0 0
        %644 = vmatprep.subr.bf16.mxu0 0
        %645 = vmatpush1.bf16.xpose.msra.mxu0 0
        %646 = vmatprep.subr.bf16.mxu0 0
        %647 = vmatpush1.bf16.xpose.msra.mxu0 0
        %648 = vmatprep.subr.bf16.mxu0 0
        %649 = vmatpush1.bf16.xpose.msra.mxu0 0
        %650 = vmatprep.subr.bf16.mxu0 0
        %651 = vmatpush1.bf16.xpose.msra.mxu0 0
        %652 = vmatprep.subr.bf16.mxu0 0
        %653 = vmatpush1.bf16.xpose.msra.mxu0 0
        %654 = vmatprep.subr.bf16.mxu0 0
        %655 = vmatpush1.bf16.xpose.msra.mxu0 0
        %656 = vmatprep.subr.bf16.mxu0 0
        %657 = vmatpush1.bf16.xpose.msra.mxu0 0
        %658 = vmatprep.subr.bf16.mxu0 0
        %659 = vmatpush1.bf16.xpose.msra.mxu0 0
        %660 = vmatprep.subr.bf16.mxu0 0
        %661 = vmatpush1.bf16.xpose.msra.mxu0 0
        %662 = vmatprep.subr.bf16.mxu0 0
        %663 = vmatpush1.bf16.xpose.msra.mxu0 0
        %664 = vmatprep.subr.bf16.mxu0 0
        %665 = vmatpush1.bf16.xpose.msra.mxu0 0
        %666 = vmatprep.mubr.bf16.mxu0 0
        %667 = vmatmul.mubr.bf16.gmra.mrb[0].mxu0 %v629
        %v668 = vpop.f32.mrb[0].mxu0
        %v669 = vadd.f32 0.0, %v668
        %v670 = vpop.f32.mrb[0].mxu0
        %v671 = vpop.f32.mrb[0].mxu0
        %v672 = vpop.f32.mrb[0].mxu0
        %673 = vdwg.mxu0
        %vm674 = vcmask 64512
        %v675 = vsel %vm674, %v669, -inf
        %676 = vmax.xlane.f32.xlu0 %v675
        %v677 = vpop.xlane.xlu0 %676
        %v678 = vsub.f32 %v669, %v677
        %v679 = vmul.f32 %v678, 1.442695
        %v680 = vpow.pop %v679
        %v681 = vsel %vm674, %v680, 0.0
        %682 = vadd.xlane.f32.xlu0 %v681
        %v683 = vpop.xlane.xlu0 %682
        %v684 = vrcp.pop %v683
        %v685 = vmul.f32 %v680, %v684
        %v686 = vpack.c.bf16 %v685, %v685
        %v688 = vsel %vm674, %v686, 0
        %vm690 = vcmask 1043456
        %v692 = vsel %vm690, %v626, 0
        %694 = vmatprep.subr.bf16.mxu0 0
        %695 = vmatpush1.bf16.msra.mxu0 %v692
        %696 = vmatprep.subr.bf16.mxu0 0
        %697 = vmatpush1.bf16.msra.mxu0 0
        %698 = vmatprep.subr.bf16.mxu0 0
        %699 = vmatpush1.bf16.msra.mxu0 0
        %700 = vmatprep.subr.bf16.mxu0 0
        %701 = vmatpush1.bf16.msra.mxu0 0
        %702 = vmatprep.subr.bf16.mxu0 0
        %703 = vmatpush1.bf16.msra.mxu0 0
        %704 = vmatprep.subr.bf16.mxu0 0
        %705 = vmatpush1.bf16.msra.mxu0 0
        %706 = vmatprep.subr.bf16.mxu0 0
        %707 = vmatpush1.bf16.msra.mxu0 0
        %708 = vmatprep.subr.bf16.mxu0 0
        %709 = vmatpush1.bf16.msra.mxu0 0
        %710 = vmatprep.subr.bf16.mxu0 0
        %711 = vmatpush1.bf16.msra.mxu0 0
        %712 = vmatprep.subr.bf16.mxu0 0
        %713 = vmatpush1.bf16.msra.mxu0 0
        %714 = vmatprep.subr.bf16.mxu0 0
        %715 = vmatpush1.bf16.msra.mxu0 0
        %716 = vmatprep.subr.bf16.mxu0 0
        %717 = vmatpush1.bf16.msra.mxu0 0
        %718 = vmatprep.subr.bf16.mxu0 0
        %719 = vmatpush1.bf16.msra.mxu0 0
        %720 = vmatprep.subr.bf16.mxu0 0
        %721 = vmatpush1.bf16.msra.mxu0 0
        %722 = vmatprep.subr.bf16.mxu0 0
        %723 = vmatpush1.bf16.msra.mxu0 0
        %724 = vmatprep.subr.bf16.mxu0 0
        %725 = vmatpush1.bf16.msra.mxu0 0
        %726 = vmatprep.mubr.bf16.mxu0 0
        %727 = vmatmul.mubr.bf16.gmra.mrb[0].mxu0 %v688
        %v728 = vpop.f32.mrb[0].mxu0
        %v729 = vadd.f32 0.0, %v728
        %v730 = vpop.f32.mrb[0].mxu0
        %v731 = vpop.f32.mrb[0].mxu0
        %v732 = vpop.f32.mrb[0].mxu0
        %733 = vdwg.mxu0
        %735 = vrot.lane.b32.xlu0 %v624, 112
        %v736 = vpop.permute.xlu0 %735
        %738 = vrot.lane.b32.xlu0 %v625, 112
        %v739 = vpop.permute.xlu0 %738
        %v741 = vsel %vm627, %v736, 0
        %v744 = vsel %vm627, %v739, 0
        %746 = vmatprep.subr.bf16.mxu0 0
        %747 = vmatpush1.bf16.xpose.msra.mxu0 %v744
        %748 = vmatprep.subr.bf16.mxu0 0
        %749 = vmatpush1.bf16.xpose.msra.mxu0 0
        %750 = vmatprep.subr.bf16.mxu0 0
        %751 = vmatpush1.bf16.xpose.msra.mxu0 0
        %752 = vmatprep.subr.bf16.mxu0 0
        %753 = vmatpush1.bf16.xpose.msra.mxu0 0
        %754 = vmatprep.subr.bf16.mxu0 0
        %755 = vmatpush1.bf16.xpose.msra.mxu0 0
        %756 = vmatprep.subr.bf16.mxu0 0
        %757 = vmatpush1.bf16.xpose.msra.mxu0 0
        %758 = vmatprep.subr.bf16.mxu0 0
        %759 = vmatpush1.bf16.xpose.msra.mxu0 0
        %760 = vmatprep.subr.bf16.mxu0 0
        %761 = vmatpush1.bf16.xpose.msra.mxu0 0
        %762 = vmatprep.subr.bf16.mxu0 0
        %763 = vmatpush1.bf16.xpose.msra.mxu0 0
        %764 = vmatprep.subr.bf16.mxu0 0
        %765 = vmatpush1.bf16.xpose.msra.mxu0 0
        %766 = vmatprep.subr.bf16.mxu0 0
        %767 = vmatpush1.bf16.xpose.msra.mxu0 0
        %768 = vmatprep.subr.bf16.mxu0 0
        %769 = vmatpush1.bf16.xpose.msra.mxu0 0
        %770 = vmatprep.subr.bf16.mxu0 0
        %771 = vmatpush1.bf16.xpose.msra.mxu0 0
        %772 = vmatprep.subr.bf16.mxu0 0
        %773 = vmatpush1.bf16.xpose.msra.mxu0 0
        %774 = vmatprep.subr.bf16.mxu0 0
        %775 = vmatpush1.bf16.xpose.msra.mxu0 0
        %776 = vmatprep.subr.bf16.mxu0 0
        %777 = vmatpush1.bf16.xpose.msra.mxu0 0
        %778 = vmatprep.mubr.bf16.mxu0 0
        %779 = vmatmul.mubr.bf16.gmra.mrb[0].mxu0 %v741
        %v780 = vpop.f32.mrb[0].mxu0
        %v781 = vadd.f32 0.0, %v780
        %v782 = vpop.f32.mrb[0].mxu0
        %v783 = vpop.f32.mrb[0].mxu0
        %v784 = vpop.f32.mrb[0].mxu0
        %785 = vdwg.mxu0
        %v786 = vsel %vm674, %v781, -inf
        %787 = vmax.xlane.f32.xlu0 %v786
        %v788 = vpop.xlane.xlu0 %787
        %v789 = vsub.f32 %v781, %v788
        %v790 = vmul.f32 %v789, 1.442695
        %v791 = vpow.pop %v790
        %v792 = vsel %vm674, %v791, 0.0
        %793 = vadd.xlane.f32.xlu0 %v792
        %v794 = vpop.xlane.xlu0 %793
        %v795 = vrcp.pop %v794
        %v796 = vmul.f32 %v791, %v795
        %v797 = vpack.c.bf16 %v796, %v796
        %799 = vrot.lane.b32.xlu0 %v626, 112
        %v800 = vpop.permute.xlu0 %799
        %v802 = vsel %vm674, %v797, 0
        %v805 = vsel %vm690, %v800, 0
        %807 = vmatprep.subr.bf16.mxu0 0
        %808 = vmatpush1.bf16.msra.mxu0 %v805
        %809 = vmatprep.subr.bf16.mxu0 0
        %810 = vmatpush1.bf16.msra.mxu0 0
        %811 = vmatprep.subr.bf16.mxu0 0
        %812 = vmatpush1.bf16.msra.mxu0 0
        %813 = vmatprep.subr.bf16.mxu0 0
        %814 = vmatpush1.bf16.msra.mxu0 0
        %815 = vmatprep.subr.bf16.mxu0 0
        %816 = vmatpush1.bf16.msra.mxu0 0
        %817 = vmatprep.subr.bf16.mxu0 0
        %818 = vmatpush1.bf16.msra.mxu0 0
        %819 = vmatprep.subr.bf16.mxu0 0
        %820 = vmatpush1.bf16.msra.mxu0 0
        %821 = vmatprep.subr.bf16.mxu0 0
        %822 = vmatpush1.bf16.msra.mxu0 0
        %823 = vmatprep.subr.bf16.mxu0 0
        %824 = vmatpush1.bf16.msra.mxu0 0
        %825 = vmatprep.subr.bf16.mxu0 0
        %826 = vmatpush1.bf16.msra.mxu0 0
        %827 = vmatprep.subr.bf16.mxu0 0
        %828 = vmatpush1.bf16.msra.mxu0 0
        %829 = vmatprep.subr.bf16.mxu0 0
        %830 = vmatpush1.bf16.msra.mxu0 0
        %831 = vmatprep.subr.bf16.mxu0 0
        %832 = vmatpush1.bf16.msra.mxu0 0
        %833 = vmatprep.subr.bf16.mxu0 0
        %834 = vmatpush1.bf16.msra.mxu0 0
        %835 = vmatprep.subr.bf16.mxu0 0
        %836 = vmatpush1.bf16.msra.mxu0 0
        %837 = vmatprep.subr.bf16.mxu0 0
        %838 = vmatpush1.bf16.msra.mxu0 0
        %839 = vmatprep.mubr.bf16.mxu0 0
        %840 = vmatmul.mubr.bf16.gmra.mrb[0].mxu0 %v802
        %v841 = vpop.f32.mrb[0].mxu0
        %v842 = vadd.f32 0.0, %v841
        %v843 = vpop.f32.mrb[0].mxu0
        %v844 = vpop.f32.mrb[0].mxu0
        %v845 = vpop.f32.mrb[0].mxu0
        %846 = vdwg.mxu0
        %847 = vrot.lane.b32.xlu0 %v624, 96
        %v848 = vpop.permute.xlu0 %847
        %849 = vrot.lane.b32.xlu0 %v625, 96
        %v850 = vpop.permute.xlu0 %849
        %v852 = vsel %vm627, %v848, 0
        %v855 = vsel %vm627, %v850, 0
        %857 = vmatprep.subr.bf16.mxu0 0
        %858 = vmatpush1.bf16.xpose.msra.mxu0 %v855
        %859 = vmatprep.subr.bf16.mxu0 0
        %860 = vmatpush1.bf16.xpose.msra.mxu0 0
        %861 = vmatprep.subr.bf16.mxu0 0
        %862 = vmatpush1.bf16.xpose.msra.mxu0 0
        %863 = vmatprep.subr.bf16.mxu0 0
        %864 = vmatpush1.bf16.xpose.msra.mxu0 0
        %865 = vmatprep.subr.bf16.mxu0 0
        %866 = vmatpush1.bf16.xpose.msra.mxu0 0
        %867 = vmatprep.subr.bf16.mxu0 0
        %868 = vmatpush1.bf16.xpose.msra.mxu0 0
        %869 = vmatprep.subr.bf16.mxu0 0
        %870 = vmatpush1.bf16.xpose.msra.mxu0 0
        %871 = vmatprep.subr.bf16.mxu0 0
        %872 = vmatpush1.bf16.xpose.msra.mxu0 0
        %873 = vmatprep.subr.bf16.mxu0 0
        %874 = vmatpush1.bf16.xpose.msra.mxu0 0
        %875 = vmatprep.subr.bf16.mxu0 0
        %876 = vmatpush1.bf16.xpose.msra.mxu0 0
        %877 = vmatprep.subr.bf16.mxu0 0
        %878 = vmatpush1.bf16.xpose.msra.mxu0 0
        %879 = vmatprep.subr.bf16.mxu0 0
        %880 = vmatpush1.bf16.xpose.msra.mxu0 0
        %881 = vmatprep.subr.bf16.mxu0 0
        %882 = vmatpush1.bf16.xpose.msra.mxu0 0
        %883 = vmatprep.subr.bf16.mxu0 0
        %884 = vmatpush1.bf16.xpose.msra.mxu0 0
        %885 = vmatprep.subr.bf16.mxu0 0
        %886 = vmatpush1.bf16.xpose.msra.mxu0 0
        %887 = vmatprep.subr.bf16.mxu0 0
        %888 = vmatpush1.bf16.xpose.msra.mxu0 0
        %889 = vmatprep.mubr.bf16.mxu0 0
        %890 = vmatmul.mubr.bf16.gmra.mrb[0].mxu0 %v852
        %v891 = vpop.f32.mrb[0].mxu0
        %v892 = vadd.f32 0.0, %v891
        %v893 = vpop.f32.mrb[0].mxu0
        %v894 = vpop.f32.mrb[0].mxu0
        %v895 = vpop.f32.mrb[0].mxu0
        %896 = vdwg.mxu0
        %v897 = vsel %vm674, %v892, -inf
        %898 = vmax.xlane.f32.xlu0 %v897
        %v899 = vpop.xlane.xlu0 %898
        %v900 = vsub.f32 %v892, %v899
        %v901 = vmul.f32 %v900, 1.442695
        %v902 = vpow.pop %v901
        %v903 = vsel %vm674, %v902, 0.0
        %904 = vadd.xlane.f32.xlu0 %v903
        %v905 = vpop.xlane.xlu0 %904
        %v906 = vrcp.pop %v905
        %v907 = vmul.f32 %v902, %v906
        %v908 = vpack.c.bf16 %v907, %v907
        %909 = vrot.lane.b32.xlu0 %v626, 96
        %v910 = vpop.permute.xlu0 %909
        %v912 = vsel %vm674, %v908, 0
        %v915 = vsel %vm690, %v910, 0
        %917 = vmatprep.subr.bf16.mxu0 0
        %918 = vmatpush1.bf16.msra.mxu0 %v915
        %919 = vmatprep.subr.bf16.mxu0 0
        %920 = vmatpush1.bf16.msra.mxu0 0
        %921 = vmatprep.subr.bf16.mxu0 0
        %922 = vmatpush1.bf16.msra.mxu0 0
        %923 = vmatprep.subr.bf16.mxu0 0
        %924 = vmatpush1.bf16.msra.mxu0 0
        %925 = vmatprep.subr.bf16.mxu0 0
        %926 = vmatpush1.bf16.msra.mxu0 0
        %927 = vmatprep.subr.bf16.mxu0 0
        %928 = vmatpush1.bf16.msra.mxu0 0
        %929 = vmatprep.subr.bf16.mxu0 0
        %930 = vmatpush1.bf16.msra.mxu0 0
        %931 = vmatprep.subr.bf16.mxu0 0
        %932 = vmatpush1.bf16.msra.mxu0 0
        %933 = vmatprep.subr.bf16.mxu0 0
        %934 = vmatpush1.bf16.msra.mxu0 0
        %935 = vmatprep.subr.bf16.mxu0 0
        %936 = vmatpush1.bf16.msra.mxu0 0
        %937 = vmatprep.subr.bf16.mxu0 0
        %938 = vmatpush1.bf16.msra.mxu0 0
        %939 = vmatprep.subr.bf16.mxu0 0
        %940 = vmatpush1.bf16.msra.mxu0 0
        %941 = vmatprep.subr.bf16.mxu0 0
        %942 = vmatpush1.bf16.msra.mxu0 0
        %943 = vmatprep.subr.bf16.mxu0 0
        %944 = vmatpush1.bf16.msra.mxu0 0
        %945 = vmatprep.subr.bf16.mxu0 0
        %946 = vmatpush1.bf16.msra.mxu0 0
        %947 = vmatprep.subr.bf16.mxu0 0
        %948 = vmatpush1.bf16.msra.mxu0 0
        %949 = vmatprep.mubr.bf16.mxu0 0
        %950 = vmatmul.mubr.bf16.gmra.mrb[0].mxu0 %v912
        %v951 = vpop.f32.mrb[0].mxu0
        %v952 = vadd.f32 0.0, %v951
        %v953 = vpop.f32.mrb[0].mxu0
        %v954 = vpop.f32.mrb[0].mxu0
        %v955 = vpop.f32.mrb[0].mxu0
        %956 = vdwg.mxu0
        %957 = vrot.lane.b32.xlu0 %v624, 80
        %v958 = vpop.permute.xlu0 %957
        %959 = vrot.lane.b32.xlu0 %v625, 80
        %v960 = vpop.permute.xlu0 %959
        %v962 = vsel %vm627, %v958, 0
        %v965 = vsel %vm627, %v960, 0
        %967 = vmatprep.subr.bf16.mxu0 0
        %968 = vmatpush1.bf16.xpose.msra.mxu0 %v965
        %969 = vmatprep.subr.bf16.mxu0 0
        %970 = vmatpush1.bf16.xpose.msra.mxu0 0
        %971 = vmatprep.subr.bf16.mxu0 0
        %972 = vmatpush1.bf16.xpose.msra.mxu0 0
        %973 = vmatprep.subr.bf16.mxu0 0
        %974 = vmatpush1.bf16.xpose.msra.mxu0 0
        %975 = vmatprep.subr.bf16.mxu0 0
        %976 = vmatpush1.bf16.xpose.msra.mxu0 0
        %977 = vmatprep.subr.bf16.mxu0 0
        %978 = vmatpush1.bf16.xpose.msra.mxu0 0
        %979 = vmatprep.subr.bf16.mxu0 0
        %980 = vmatpush1.bf16.xpose.msra.mxu0 0
        %981 = vmatprep.subr.bf16.mxu0 0
        %982 = vmatpush1.bf16.xpose.msra.mxu0 0
        %983 = vmatprep.subr.bf16.mxu0 0
        %984 = vmatpush1.bf16.xpose.msra.mxu0 0
        %985 = vmatprep.subr.bf16.mxu0 0
        %986 = vmatpush1.bf16.xpose.msra.mxu0 0
        %987 = vmatprep.subr.bf16.mxu0 0
        %988 = vmatpush1.bf16.xpose.msra.mxu0 0
        %989 = vmatprep.subr.bf16.mxu0 0
        %990 = vmatpush1.bf16.xpose.msra.mxu0 0
        %991 = vmatprep.subr.bf16.mxu0 0
        %992 = vmatpush1.bf16.xpose.msra.mxu0 0
        %993 = vmatprep.subr.bf16.mxu0 0
        %994 = vmatpush1.bf16.xpose.msra.mxu0 0
        %995 = vmatprep.subr.bf16.mxu0 0
        %996 = vmatpush1.bf16.xpose.msra.mxu0 0
        %997 = vmatprep.subr.bf16.mxu0 0
        %998 = vmatpush1.bf16.xpose.msra.mxu0 0
        %999 = vmatprep.mubr.bf16.mxu0 0
        %1000 = vmatmul.mubr.bf16.gmra.mrb[0].mxu0 %v962
        %v1001 = vpop.f32.mrb[0].mxu0
        %v1002 = vadd.f32 0.0, %v1001
        %v1003 = vpop.f32.mrb[0].mxu0
        %v1004 = vpop.f32.mrb[0].mxu0
        %v1005 = vpop.f32.mrb[0].mxu0
        %1006 = vdwg.mxu0
        %v1007 = vsel %vm674, %v1002, -inf
        %1008 = vmax.xlane.f32.xlu0 %v1007
        %v1009 = vpop.xlane.xlu0 %1008
        %v1010 = vsub.f32 %v1002, %v1009
        %v1011 = vmul.f32 %v1010, 1.442695
        %v1012 = vpow.pop %v1011
        %v1013 = vsel %vm674, %v1012, 0.0
        %1014 = vadd.xlane.f32.xlu0 %v1013
        %v1015 = vpop.xlane.xlu0 %1014
        %v1016 = vrcp.pop %v1015
        %v1017 = vmul.f32 %v1012, %v1016
        %v1018 = vpack.c.bf16 %v1017, %v1017
        %1019 = vrot.lane.b32.xlu0 %v626, 80
        %v1020 = vpop.permute.xlu0 %1019
        %v1022 = vsel %vm674, %v1018, 0
        %v1025 = vsel %vm690, %v1020, 0
        %1027 = vmatprep.subr.bf16.mxu0 0
        %1028 = vmatpush1.bf16.msra.mxu0 %v1025
        %1029 = vmatprep.subr.bf16.mxu0 0
        %1030 = vmatpush1.bf16.msra.mxu0 0
        %1031 = vmatprep.subr.bf16.mxu0 0
        %1032 = vmatpush1.bf16.msra.mxu0 0
        %1033 = vmatprep.subr.bf16.mxu0 0
        %1034 = vmatpush1.bf16.msra.mxu0 0
        %1035 = vmatprep.subr.bf16.mxu0 0
        %1036 = vmatpush1.bf16.msra.mxu0 0
        %1037 = vmatprep.subr.bf16.mxu0 0
        %1038 = vmatpush1.bf16.msra.mxu0 0
        %1039 = vmatprep.subr.bf16.mxu0 0
        %1040 = vmatpush1.bf16.msra.mxu0 0
        %1041 = vmatprep.subr.bf16.mxu0 0
        %1042 = vmatpush1.bf16.msra.mxu0 0
        %1043 = vmatprep.subr.bf16.mxu0 0
        %1044 = vmatpush1.bf16.msra.mxu0 0
        %1045 = vmatprep.subr.bf16.mxu0 0
        %1046 = vmatpush1.bf16.msra.mxu0 0
        %1047 = vmatprep.subr.bf16.mxu0 0
        %1048 = vmatpush1.bf16.msra.mxu0 0
        %1049 = vmatprep.subr.bf16.mxu0 0
        %1050 = vmatpush1.bf16.msra.mxu0 0
        %1051 = vmatprep.subr.bf16.mxu0 0
        %1052 = vmatpush1.bf16.msra.mxu0 0
        %1053 = vmatprep.subr.bf16.mxu0 0
        %1054 = vmatpush1.bf16.msra.mxu0 0
        %1055 = vmatprep.subr.bf16.mxu0 0
        %1056 = vmatpush1.bf16.msra.mxu0 0
        %1057 = vmatprep.subr.bf16.mxu0 0
        %1058 = vmatpush1.bf16.msra.mxu0 0
        %1059 = vmatprep.mubr.bf16.mxu0 0
        %1060 = vmatmul.mubr.bf16.gmra.mrb[0].mxu0 %v1022
        %v1061 = vpop.f32.mrb[0].mxu0
        %v1062 = vadd.f32 0.0, %v1061
        %v1063 = vpop.f32.mrb[0].mxu0
        %v1064 = vpop.f32.mrb[0].mxu0
        %v1065 = vpop.f32.mrb[0].mxu0
        %1066 = vdwg.mxu0
        %1067 = vrot.lane.b32.xlu0 %v624, 64
        %v1068 = vpop.permute.xlu0 %1067
        %1069 = vrot.lane.b32.xlu0 %v625, 64
        %v1070 = vpop.permute.xlu0 %1069
        %v1072 = vsel %vm627, %v1068, 0
        %v1075 = vsel %vm627, %v1070, 0
        %1077 = vmatprep.subr.bf16.mxu0 0
        %1078 = vmatpush1.bf16.xpose.msra.mxu0 %v1075
        %1079 = vmatprep.subr.bf16.mxu0 0
        %1080 = vmatpush1.bf16.xpose.msra.mxu0 0
        %1081 = vmatprep.subr.bf16.mxu0 0
        %1082 = vmatpush1.bf16.xpose.msra.mxu0 0
        %1083 = vmatprep.subr.bf16.mxu0 0
        %1084 = vmatpush1.bf16.xpose.msra.mxu0 0
        %1085 = vmatprep.subr.bf16.mxu0 0
        %1086 = vmatpush1.bf16.xpose.msra.mxu0 0
        %1087 = vmatprep.subr.bf16.mxu0 0
        %1088 = vmatpush1.bf16.xpose.msra.mxu0 0
        %1089 = vmatprep.subr.bf16.mxu0 0
        %1090 = vmatpush1.bf16.xpose.msra.mxu0 0
        %1091 = vmatprep.subr.bf16.mxu0 0
        %1092 = vmatpush1.bf16.xpose.msra.mxu0 0
        %1093 = vmatprep.subr.bf16.mxu0 0
        %1094 = vmatpush1.bf16.xpose.msra.mxu0 0
        %1095 = vmatprep.subr.bf16.mxu0 0
        %1096 = vmatpush1.bf16.xpose.msra.mxu0 0
        %1097 = vmatprep.subr.bf16.mxu0 0
        %1098 = vmatpush1.bf16.xpose.msra.mxu0 0
        %1099 = vmatprep.subr.bf16.mxu0 0
        %1100 = vmatpush1.bf16.xpose.msra.mxu0 0
        %1101 = vmatprep.subr.bf16.mxu0 0
        %1102 = vmatpush1.bf16.xpose.msra.mxu0 0
        %1103 = vmatprep.subr.bf16.mxu0 0
        %1104 = vmatpush1.bf16.xpose.msra.mxu0 0
        %1105 = vmatprep.subr.bf16.mxu0 0
        %1106 = vmatpush1.bf16.xpose.msra.mxu0 0
        %1107 = vmatprep.subr.bf16.mxu0 0
        %1108 = vmatpush1.bf16.xpose.msra.mxu0 0
        %1109 = vmatprep.mubr.bf16.mxu0 0
        %1110 = vmatmul.mubr.bf16.gmra.mrb[0].mxu0 %v1072
        %v1111 = vpop.f32.mrb[0].mxu0
        %v1112 = vadd.f32 0.0, %v1111
        %v1113 = vpop.f32.mrb[0].mxu0
        %v1114 = vpop.f32.mrb[0].mxu0
        %v1115 = vpop.f32.mrb[0].mxu0
        %1116 = vdwg.mxu0
        %v1117 = vsel %vm674, %v1112, -inf
        %1118 = vmax.xlane.f32.xlu0 %v1117
        %v1119 = vpop.xlane.xlu0 %1118
        %v1120 = vsub.f32 %v1112, %v1119
        %v1121 = vmul.f32 %v1120, 1.442695
        %v1122 = vpow.pop %v1121
        %v1123 = vsel %vm674, %v1122, 0.0
        %1124 = vadd.xlane.f32.xlu0 %v1123
        %v1125 = vpop.xlane.xlu0 %1124
        %v1126 = vrcp.pop %v1125
        %v1127 = vmul.f32 %v1122, %v1126
        %v1128 = vpack.c.bf16 %v1127, %v1127
        %1129 = vrot.lane.b32.xlu0 %v626, 64
        %v1130 = vpop.permute.xlu0 %1129
        %v1132 = vsel %vm674, %v1128, 0
        %v1135 = vsel %vm690, %v1130, 0
        %1137 = vmatprep.subr.bf16.mxu0 0
        %1138 = vmatpush1.bf16.msra.mxu0 %v1135
        %1139 = vmatprep.subr.bf16.mxu0 0
        %1140 = vmatpush1.bf16.msra.mxu0 0
        %1141 = vmatprep.subr.bf16.mxu0 0
        %1142 = vmatpush1.bf16.msra.mxu0 0
        %1143 = vmatprep.subr.bf16.mxu0 0
        %1144 = vmatpush1.bf16.msra.mxu0 0
        %1145 = vmatprep.subr.bf16.mxu0 0
        %1146 = vmatpush1.bf16.msra.mxu0 0
        %1147 = vmatprep.subr.bf16.mxu0 0
        %1148 = vmatpush1.bf16.msra.mxu0 0
        %1149 = vmatprep.subr.bf16.mxu0 0
        %1150 = vmatpush1.bf16.msra.mxu0 0
        %1151 = vmatprep.subr.bf16.mxu0 0
        %1152 = vmatpush1.bf16.msra.mxu0 0
        %1153 = vmatprep.subr.bf16.mxu0 0
        %1154 = vmatpush1.bf16.msra.mxu0 0
        %1155 = vmatprep.subr.bf16.mxu0 0
        %1156 = vmatpush1.bf16.msra.mxu0 0
        %1157 = vmatprep.subr.bf16.mxu0 0
        %1158 = vmatpush1.bf16.msra.mxu0 0
        %1159 = vmatprep.subr.bf16.mxu0 0
        %1160 = vmatpush1.bf16.msra.mxu0 0
        %1161 = vmatprep.subr.bf16.mxu0 0
        %1162 = vmatpush1.bf16.msra.mxu0 0
        %1163 = vmatprep.subr.bf16.mxu0 0
        %1164 = vmatpush1.bf16.msra.mxu0 0
        %1165 = vmatprep.subr.bf16.mxu0 0
        %1166 = vmatpush1.bf16.msra.mxu0 0
        %1167 = vmatprep.subr.bf16.mxu0 0
        %1168 = vmatpush1.bf16.msra.mxu0 0
        %1169 = vmatprep.mubr.bf16.mxu0 0
        %1170 = vmatmul.mubr.bf16.gmra.mrb[0].mxu0 %v1132
        %v1171 = vpop.f32.mrb[0].mxu0
        %v1172 = vadd.f32 0.0, %v1171
        %v1173 = vpop.f32.mrb[0].mxu0
        %v1174 = vpop.f32.mrb[0].mxu0
        %v1175 = vpop.f32.mrb[0].mxu0
        %1176 = vdwg.mxu0
        %1177 = vrot.lane.b32.xlu0 %v624, 48
        %v1178 = vpop.permute.xlu0 %1177
        %1179 = vrot.lane.b32.xlu0 %v625, 48
        %v1180 = vpop.permute.xlu0 %1179
        %v1182 = vsel %vm627, %v1178, 0
        %v1185 = vsel %vm627, %v1180, 0
        %1187 = vmatprep.subr.bf16.mxu0 0
        %1188 = vmatpush1.bf16.xpose.msra.mxu0 %v1185
        %1189 = vmatprep.subr.bf16.mxu0 0
        %1190 = vmatpush1.bf16.xpose.msra.mxu0 0
        %1191 = vmatprep.subr.bf16.mxu0 0
        %1192 = vmatpush1.bf16.xpose.msra.mxu0 0
        %1193 = vmatprep.subr.bf16.mxu0 0
        %1194 = vmatpush1.bf16.xpose.msra.mxu0 0
        %1195 = vmatprep.subr.bf16.mxu0 0
        %1196 = vmatpush1.bf16.xpose.msra.mxu0 0
        %1197 = vmatprep.subr.bf16.mxu0 0
        %1198 = vmatpush1.bf16.xpose.msra.mxu0 0
        %1199 = vmatprep.subr.bf16.mxu0 0
        %1200 = vmatpush1.bf16.xpose.msra.mxu0 0
        %1201 = vmatprep.subr.bf16.mxu0 0
        %1202 = vmatpush1.bf16.xpose.msra.mxu0 0
        %1203 = vmatprep.subr.bf16.mxu0 0
        %1204 = vmatpush1.bf16.xpose.msra.mxu0 0
        %1205 = vmatprep.subr.bf16.mxu0 0
        %1206 = vmatpush1.bf16.xpose.msra.mxu0 0
        %1207 = vmatprep.subr.bf16.mxu0 0
        %1208 = vmatpush1.bf16.xpose.msra.mxu0 0
        %1209 = vmatprep.subr.bf16.mxu0 0
        %1210 = vmatpush1.bf16.xpose.msra.mxu0 0
        %1211 = vmatprep.subr.bf16.mxu0 0
        %1212 = vmatpush1.bf16.xpose.msra.mxu0 0
        %1213 = vmatprep.subr.bf16.mxu0 0
        %1214 = vmatpush1.bf16.xpose.msra.mxu0 0
        %1215 = vmatprep.subr.bf16.mxu0 0
        %1216 = vmatpush1.bf16.xpose.msra.mxu0 0
        %1217 = vmatprep.subr.bf16.mxu0 0
        %1218 = vmatpush1.bf16.xpose.msra.mxu0 0
        %1219 = vmatprep.mubr.bf16.mxu0 0
        %1220 = vmatmul.mubr.bf16.gmra.mrb[0].mxu0 %v1182
        %v1221 = vpop.f32.mrb[0].mxu0
        %v1222 = vadd.f32 0.0, %v1221
        %v1223 = vpop.f32.mrb[0].mxu0
        %v1224 = vpop.f32.mrb[0].mxu0
        %v1225 = vpop.f32.mrb[0].mxu0
        %1226 = vdwg.mxu0
        %v1227 = vsel %vm674, %v1222, -inf
        %1228 = vmax.xlane.f32.xlu0 %v1227
        %v1229 = vpop.xlane.xlu0 %1228
        %v1230 = vsub.f32 %v1222, %v1229
        %v1231 = vmul.f32 %v1230, 1.442695
        %v1232 = vpow.pop %v1231
        %v1233 = vsel %vm674, %v1232, 0.0
        %1234 = vadd.xlane.f32.xlu0 %v1233
        %v1235 = vpop.xlane.xlu0 %1234
        %v1236 = vrcp.pop %v1235
        %v1237 = vmul.f32 %v1232, %v1236
        %v1238 = vpack.c.bf16 %v1237, %v1237
        %1239 = vrot.lane.b32.xlu0 %v626, 48
        %v1240 = vpop.permute.xlu0 %1239
        %v1242 = vsel %vm674, %v1238, 0
        %v1245 = vsel %vm690, %v1240, 0
        %1247 = vmatprep.subr.bf16.mxu0 0
        %1248 = vmatpush1.bf16.msra.mxu0 %v1245
        %1249 = vmatprep.subr.bf16.mxu0 0
        %1250 = vmatpush1.bf16.msra.mxu0 0
        %1251 = vmatprep.subr.bf16.mxu0 0
        %1252 = vmatpush1.bf16.msra.mxu0 0
        %1253 = vmatprep.subr.bf16.mxu0 0
        %1254 = vmatpush1.bf16.msra.mxu0 0
        %1255 = vmatprep.subr.bf16.mxu0 0
        %1256 = vmatpush1.bf16.msra.mxu0 0
        %1257 = vmatprep.subr.bf16.mxu0 0
        %1258 = vmatpush1.bf16.msra.mxu0 0
        %1259 = vmatprep.subr.bf16.mxu0 0
        %1260 = vmatpush1.bf16.msra.mxu0 0
        %1261 = vmatprep.subr.bf16.mxu0 0
        %1262 = vmatpush1.bf16.msra.mxu0 0
        %1263 = vmatprep.subr.bf16.mxu0 0
        %1264 = vmatpush1.bf16.msra.mxu0 0
        %1265 = vmatprep.subr.bf16.mxu0 0
        %1266 = vmatpush1.bf16.msra.mxu0 0
        %1267 = vmatprep.subr.bf16.mxu0 0
        %1268 = vmatpush1.bf16.msra.mxu0 0
        %1269 = vmatprep.subr.bf16.mxu0 0
        %1270 = vmatpush1.bf16.msra.mxu0 0
        %1271 = vmatprep.subr.bf16.mxu0 0
        %1272 = vmatpush1.bf16.msra.mxu0 0
        %1273 = vmatprep.subr.bf16.mxu0 0
        %1274 = vmatpush1.bf16.msra.mxu0 0
        %1275 = vmatprep.subr.bf16.mxu0 0
        %1276 = vmatpush1.bf16.msra.mxu0 0
        %1277 = vmatprep.subr.bf16.mxu0 0
        %1278 = vmatpush1.bf16.msra.mxu0 0
        %1279 = vmatprep.mubr.bf16.mxu0 0
        %1280 = vmatmul.mubr.bf16.gmra.mrb[0].mxu0 %v1242
        %v1281 = vpop.f32.mrb[0].mxu0
        %v1282 = vadd.f32 0.0, %v1281
        %v1283 = vpop.f32.mrb[0].mxu0
        %v1284 = vpop.f32.mrb[0].mxu0
        %v1285 = vpop.f32.mrb[0].mxu0
        %1286 = vdwg.mxu0
        %1287 = vrot.lane.b32.xlu0 %v624, 32
        %v1288 = vpop.permute.xlu0 %1287
        %1289 = vrot.lane.b32.xlu0 %v625, 32
        %v1290 = vpop.permute.xlu0 %1289
        %v1292 = vsel %vm627, %v1288, 0
        %v1295 = vsel %vm627, %v1290, 0
        %1297 = vmatprep.subr.bf16.mxu0 0
        %1298 = vmatpush1.bf16.xpose.msra.mxu0 %v1295
        %1299 = vmatprep.subr.bf16.mxu0 0
        %1300 = vmatpush1.bf16.xpose.msra.mxu0 0
        %1301 = vmatprep.subr.bf16.mxu0 0
        %1302 = vmatpush1.bf16.xpose.msra.mxu0 0
        %1303 = vmatprep.subr.bf16.mxu0 0
        %1304 = vmatpush1.bf16.xpose.msra.mxu0 0
        %1305 = vmatprep.subr.bf16.mxu0 0
        %1306 = vmatpush1.bf16.xpose.msra.mxu0 0
        %1307 = vmatprep.subr.bf16.mxu0 0
        %1308 = vmatpush1.bf16.xpose.msra.mxu0 0
        %1309 = vmatprep.subr.bf16.mxu0 0
        %1310 = vmatpush1.bf16.xpose.msra.mxu0 0
        %1311 = vmatprep.subr.bf16.mxu0 0
        %1312 = vmatpush1.bf16.xpose.msra.mxu0 0
        %1313 = vmatprep.subr.bf16.mxu0 0
        %1314 = vmatpush1.bf16.xpose.msra.mxu0 0
        %1315 = vmatprep.subr.bf16.mxu0 0
        %1316 = vmatpush1.bf16.xpose.msra.mxu0 0
        %1317 = vmatprep.subr.bf16.mxu0 0
        %1318 = vmatpush1.bf16.xpose.msra.mxu0 0
        %1319 = vmatprep.subr.bf16.mxu0 0
        %1320 = vmatpush1.bf16.xpose.msra.mxu0 0
        %1321 = vmatprep.subr.bf16.mxu0 0
        %1322 = vmatpush1.bf16.xpose.msra.mxu0 0
        %1323 = vmatprep.subr.bf16.mxu0 0
        %1324 = vmatpush1.bf16.xpose.msra.mxu0 0
        %1325 = vmatprep.subr.bf16.mxu0 0
        %1326 = vmatpush1.bf16.xpose.msra.mxu0 0
        %1327 = vmatprep.subr.bf16.mxu0 0
        %1328 = vmatpush1.bf16.xpose.msra.mxu0 0
        %1329 = vmatprep.mubr.bf16.mxu0 0
        %1330 = vmatmul.mubr.bf16.gmra.mrb[0].mxu0 %v1292
        %v1331 = vpop.f32.mrb[0].mxu0
        %v1332 = vadd.f32 0.0, %v1331
        %v1333 = vpop.f32.mrb[0].mxu0
        %v1334 = vpop.f32.mrb[0].mxu0
        %v1335 = vpop.f32.mrb[0].mxu0
        %1336 = vdwg.mxu0
        %v1337 = vsel %vm674, %v1332, -inf
        %1338 = vmax.xlane.f32.xlu0 %v1337
        %v1339 = vpop.xlane.xlu0 %1338
        %v1340 = vsub.f32 %v1332, %v1339
        %v1341 = vmul.f32 %v1340, 1.442695
        %v1342 = vpow.pop %v1341
        %v1343 = vsel %vm674, %v1342, 0.0
        %1344 = vadd.xlane.f32.xlu0 %v1343
        %v1345 = vpop.xlane.xlu0 %1344
        %v1346 = vrcp.pop %v1345
        %v1347 = vmul.f32 %v1342, %v1346
        %v1348 = vpack.c.bf16 %v1347, %v1347
        %1349 = vrot.lane.b32.xlu0 %v626, 32
        %v1350 = vpop.permute.xlu0 %1349
        %v1352 = vsel %vm674, %v1348, 0
        %v1355 = vsel %vm690, %v1350, 0
        %1357 = vmatprep.subr.bf16.mxu0 0
        %1358 = vmatpush1.bf16.msra.mxu0 %v1355
        %1359 = vmatprep.subr.bf16.mxu0 0
        %1360 = vmatpush1.bf16.msra.mxu0 0
        %1361 = vmatprep.subr.bf16.mxu0 0
        %1362 = vmatpush1.bf16.msra.mxu0 0
        %1363 = vmatprep.subr.bf16.mxu0 0
        %1364 = vmatpush1.bf16.msra.mxu0 0
        %1365 = vmatprep.subr.bf16.mxu0 0
        %1366 = vmatpush1.bf16.msra.mxu0 0
        %1367 = vmatprep.subr.bf16.mxu0 0
        %1368 = vmatpush1.bf16.msra.mxu0 0
        %1369 = vmatprep.subr.bf16.mxu0 0
        %1370 = vmatpush1.bf16.msra.mxu0 0
        %1371 = vmatprep.subr.bf16.mxu0 0
        %1372 = vmatpush1.bf16.msra.mxu0 0
        %1373 = vmatprep.subr.bf16.mxu0 0
        %1374 = vmatpush1.bf16.msra.mxu0 0
        %1375 = vmatprep.subr.bf16.mxu0 0
        %1376 = vmatpush1.bf16.msra.mxu0 0
        %1377 = vmatprep.subr.bf16.mxu0 0
        %1378 = vmatpush1.bf16.msra.mxu0 0
        %1379 = vmatprep.subr.bf16.mxu0 0
        %1380 = vmatpush1.bf16.msra.mxu0 0
        %1381 = vmatprep.subr.bf16.mxu0 0
        %1382 = vmatpush1.bf16.msra.mxu0 0
        %1383 = vmatprep.subr.bf16.mxu0 0
        %1384 = vmatpush1.bf16.msra.mxu0 0
        %1385 = vmatprep.subr.bf16.mxu0 0
        %1386 = vmatpush1.bf16.msra.mxu0 0
        %1387 = vmatprep.subr.bf16.mxu0 0
        %1388 = vmatpush1.bf16.msra.mxu0 0
        %1389 = vmatprep.mubr.bf16.mxu0 0
        %1390 = vmatmul.mubr.bf16.gmra.mrb[0].mxu0 %v1352
        %v1391 = vpop.f32.mrb[0].mxu0
        %v1392 = vadd.f32 0.0, %v1391
        %v1393 = vpop.f32.mrb[0].mxu0
        %v1394 = vpop.f32.mrb[0].mxu0
        %v1395 = vpop.f32.mrb[0].mxu0
        %1396 = vdwg.mxu0
        %1397 = vrot.lane.b32.xlu0 %v624, 16
        %v1398 = vpop.permute.xlu0 %1397
        %1399 = vrot.lane.b32.xlu0 %v625, 16
        %v1400 = vpop.permute.xlu0 %1399
        %v1402 = vsel %vm627, %v1398, 0
        %v1405 = vsel %vm627, %v1400, 0
        %1407 = vmatprep.subr.bf16.mxu0 0
        %1408 = vmatpush1.bf16.xpose.msra.mxu0 %v1405
        %1409 = vmatprep.subr.bf16.mxu0 0
        %1410 = vmatpush1.bf16.xpose.msra.mxu0 0
        %1411 = vmatprep.subr.bf16.mxu0 0
        %1412 = vmatpush1.bf16.xpose.msra.mxu0 0
        %1413 = vmatprep.subr.bf16.mxu0 0
        %1414 = vmatpush1.bf16.xpose.msra.mxu0 0
        %1415 = vmatprep.subr.bf16.mxu0 0
        %1416 = vmatpush1.bf16.xpose.msra.mxu0 0
        %1417 = vmatprep.subr.bf16.mxu0 0
        %1418 = vmatpush1.bf16.xpose.msra.mxu0 0
        %1419 = vmatprep.subr.bf16.mxu0 0
        %1420 = vmatpush1.bf16.xpose.msra.mxu0 0
        %1421 = vmatprep.subr.bf16.mxu0 0
        %1422 = vmatpush1.bf16.xpose.msra.mxu0 0
        %1423 = vmatprep.subr.bf16.mxu0 0
        %1424 = vmatpush1.bf16.xpose.msra.mxu0 0
        %1425 = vmatprep.subr.bf16.mxu0 0
        %1426 = vmatpush1.bf16.xpose.msra.mxu0 0
        %1427 = vmatprep.subr.bf16.mxu0 0
        %1428 = vmatpush1.bf16.xpose.msra.mxu0 0
        %1429 = vmatprep.subr.bf16.mxu0 0
        %1430 = vmatpush1.bf16.xpose.msra.mxu0 0
        %1431 = vmatprep.subr.bf16.mxu0 0
        %1432 = vmatpush1.bf16.xpose.msra.mxu0 0
        %1433 = vmatprep.subr.bf16.mxu0 0
        %1434 = vmatpush1.bf16.xpose.msra.mxu0 0
        %1435 = vmatprep.subr.bf16.mxu0 0
        %1436 = vmatpush1.bf16.xpose.msra.mxu0 0
        %1437 = vmatprep.subr.bf16.mxu0 0
        %1438 = vmatpush1.bf16.xpose.msra.mxu0 0
        %1439 = vmatprep.mubr.bf16.mxu0 0
        %1440 = vmatmul.mubr.bf16.gmra.mrb[0].mxu0 %v1402
        %v1441 = vpop.f32.mrb[0].mxu0
        %v1442 = vadd.f32 0.0, %v1441
        %v1443 = vpop.f32.mrb[0].mxu0
        %v1444 = vpop.f32.mrb[0].mxu0
        %v1445 = vpop.f32.mrb[0].mxu0
        %1446 = vdwg.mxu0
        %v1447 = vsel %vm674, %v1442, -inf
        %1448 = vmax.xlane.f32.xlu0 %v1447
        %v1449 = vpop.xlane.xlu0 %1448
        %v1450 = vsub.f32 %v1442, %v1449
        %v1451 = vmul.f32 %v1450, 1.442695
        %v1452 = vpow.pop %v1451
        %v1453 = vsel %vm674, %v1452, 0.0
        %1454 = vadd.xlane.f32.xlu0 %v1453
        %v1455 = vpop.xlane.xlu0 %1454
        %v1456 = vrcp.pop %v1455
        %v1457 = vmul.f32 %v1452, %v1456
        %v1458 = vpack.c.bf16 %v1457, %v1457
        %1459 = vrot.lane.b32.xlu0 %v626, 16
        %v1460 = vpop.permute.xlu0 %1459
        %v1462 = vsel %vm674, %v1458, 0
        %v1465 = vsel %vm690, %v1460, 0
        %1467 = vmatprep.subr.bf16.mxu0 0
        %1468 = vmatpush1.bf16.msra.mxu0 %v1465
        %1469 = vmatprep.subr.bf16.mxu0 0
        %1470 = vmatpush1.bf16.msra.mxu0 0
        %1471 = vmatprep.subr.bf16.mxu0 0
        %1472 = vmatpush1.bf16.msra.mxu0 0
        %1473 = vmatprep.subr.bf16.mxu0 0
        %1474 = vmatpush1.bf16.msra.mxu0 0
        %1475 = vmatprep.subr.bf16.mxu0 0
        %1476 = vmatpush1.bf16.msra.mxu0 0
        %1477 = vmatprep.subr.bf16.mxu0 0
        %1478 = vmatpush1.bf16.msra.mxu0 0
        %1479 = vmatprep.subr.bf16.mxu0 0
        %1480 = vmatpush1.bf16.msra.mxu0 0
        %1481 = vmatprep.subr.bf16.mxu0 0
        %1482 = vmatpush1.bf16.msra.mxu0 0
        %1483 = vmatprep.subr.bf16.mxu0 0
        %1484 = vmatpush1.bf16.msra.mxu0 0
        %1485 = vmatprep.subr.bf16.mxu0 0
        %1486 = vmatpush1.bf16.msra.mxu0 0
        %1487 = vmatprep.subr.bf16.mxu0 0
        %1488 = vmatpush1.bf16.msra.mxu0 0
        %1489 = vmatprep.subr.bf16.mxu0 0
        %1490 = vmatpush1.bf16.msra.mxu0 0
        %1491 = vmatprep.subr.bf16.mxu0 0
        %1492 = vmatpush1.bf16.msra.mxu0 0
        %1493 = vmatprep.subr.bf16.mxu0 0
        %1494 = vmatpush1.bf16.msra.mxu0 0
        %1495 = vmatprep.subr.bf16.mxu0 0
        %1496 = vmatpush1.bf16.msra.mxu0 0
        %1497 = vmatprep.subr.bf16.mxu0 0
        %1498 = vmatpush1.bf16.msra.mxu0 0
        %1499 = vmatprep.mubr.bf16.mxu0 0
        %1500 = vmatmul.mubr.bf16.gmra.mrb[0].mxu0 %v1462
        %v1501 = vpop.f32.mrb[0].mxu0
        %v1502 = vadd.f32 0.0, %v1501
        %v1503 = vpop.f32.mrb[0].mxu0
        %v1504 = vpop.f32.mrb[0].mxu0
        %v1505 = vpop.f32.mrb[0].mxu0
        %1506 = vdwg.mxu0
        %1508 = vrot.lane.b32.xlu0 %v842, 16
        %v1509 = vpop.permute.xlu0 %1508
        %1512 = vrot.lane.b32.xlu0 %v952, 32
        %v1513 = vpop.permute.xlu0 %1512
        %1516 = vrot.lane.b32.xlu0 %v1062, 48
        %v1517 = vpop.permute.xlu0 %1516
        %1520 = vrot.lane.b32.xlu0 %v1172, 64
        %v1521 = vpop.permute.xlu0 %1520
        %1524 = vrot.lane.b32.xlu0 %v1282, 80
        %v1525 = vpop.permute.xlu0 %1524
        %1528 = vrot.lane.b32.xlu0 %v1392, 96
        %v1529 = vpop.permute.xlu0 %1528
        %1532 = vrot.lane.b32.xlu0 %v1502, 112
        %v1533 = vpop.permute.xlu0 %1532
        %v1535 = vsel %vm627, %v729, %v1509
        %vm1536 = vcmask 261120
        %v1537 = vsel %vm1536, %v1535, %v1513
        %vm1538 = vcmask 392192
        %v1539 = vsel %vm1538, %v1537, %v1517
        %vm1540 = vcmask 523264
        %v1541 = vsel %vm1540, %v1539, %v1521
        %vm1542 = vcmask 654336
        %v1543 = vsel %vm1542, %v1541, %v1525
        %vm1544 = vcmask 785408
        %v1545 = vsel %vm1544, %v1543, %v1529
        %vm1546 = vcmask 916480
        %v1547 = vsel %vm1546, %v1545, %v1533
        %v1548 = vpack.c.bf16 %v1547, %v1547
        %v1549 = vpack.c.bf16 %v796, %v685
        %v1550 = vpack.c.bf16 %v1017, %v907
        %v1551 = vpack.c.bf16 %v1237, %v1127
        %v1552 = vpack.c.bf16 %v1457, %v1347
        %v1557 = vunpack.c.l.b16 %v1549
        %v1558 = vunpack.c.h.b16 %v1549
        %v1559 = vunpack.c.l.b16 %v1550
        %v1560 = vunpack.c.h.b16 %v1550
        %v1561 = vunpack.c.l.b16 %v1551
        %v1562 = vunpack.c.h.b16 %v1551
        %v1563 = vunpack.c.l.b16 %v1552
        %v1564 = vunpack.c.h.b16 %v1552
        %v1565 = vpack.c.b16 %v1557, %v1557
        %v1566 = vpack.c.b16 %v1558, %v1558
        %v1567 = vpack.c.b16 %v1559, %v1559
        %v1568 = vpack.c.b16 %v1560, %v1560
        %v1569 = vpack.c.b16 %v1561, %v1561
        %v1570 = vpack.c.b16 %v1562, %v1562
        %v1571 = vpack.c.b16 %v1563, %v1563
        %v1572 = vpack.c.b16 %v1564, %v1564
        %vm1581 = vcmask 60416
        %1582 = vst.msk [vmem:[%s362] sm:$0xf] %vm1581, %v1565
        %1583 = vst.msk [vmem:[%s362 + $0x4] sm:$0xf] %vm1581, %v1566
        %1584 = vst.msk [vmem:[%s362 + $0x8] sm:$0xf] %vm1581, %v1567
        %1585 = vst.msk [vmem:[%s362 + $0xc] sm:$0xf] %vm1581, %v1568
        %1586 = vst.msk [vmem:[%s362 + $0x10] sm:$0xf] %vm1581, %v1569
        %1587 = vst.msk [vmem:[%s362 + $0x14] sm:$0xf] %vm1581, %v1570
        %1588 = vst.msk [vmem:[%s362 + $0x18] sm:$0xf] %vm1581, %v1571
        %1589 = vst.msk [vmem:[%s362 + $0x1c] sm:$0xf] %vm1581, %v1572
        %v1590 = vld [vmem:[#allocation7] sm:$0xf]
        %v1591 = vld [vmem:[#allocation7 + $0x4] sm:$0xf]
        %v1592 = vld [vmem:[#allocation7 + $0x8] sm:$0xf]
        %v1593 = vld [vmem:[#allocation7 + $0xc] sm:$0xf]
        %v1594 = vld [vmem:[#allocation7 + $0x10] sm:$0xf]
        %v1595 = vld [vmem:[#allocation7 + $0x14] sm:$0xf]
        %v1596 = vld [vmem:[#allocation7 + $0x18] sm:$0xf]
        %v1597 = vld [vmem:[#allocation7 + $0x1c] sm:$0xf]
        %v1598 = vld [vmem:[#allocation7 + $0x20] sm:$0xf]
        %v1599 = vld [vmem:[#allocation7 + $0x24] sm:$0xf]
        %v1600 = vld [vmem:[#allocation7 + $0x28] sm:$0xf]
        %v1601 = vld [vmem:[#allocation7 + $0x2c] sm:$0xf]
        %v1602 = vld [vmem:[#allocation7 + $0x30] sm:$0xf]
        %v1603 = vld [vmem:[#allocation7 + $0x34] sm:$0xf]
        %v1604 = vld [vmem:[#allocation7 + $0x38] sm:$0xf]
        %v1605 = vld [vmem:[#allocation7 + $0x3c] sm:$0xf]
        %v1606 = vld [vmem:[%s4] sm:$0x1]
        %v1607 = vld [vmem:[%s5] sm:$0x1]
        %v1608 = vld [vmem:[%s6] sm:$0x1]
        %v1610 = vlaneseq
        %v1611 = vshrl.u32 %v1610, 7
        %v1612 = vsub.s32 0, %v1611
        %v1613 = vrot.slane %v1606, %v1612
        %v1631 = vunpack.c.l.b16 %v1590
        %v1632 = vunpack.c.l.b16 %v1591
        %v1633 = vunpack.c.l.b16 %v1592
        %v1634 = vunpack.c.l.b16 %v1593
        %v1635 = vunpack.c.l.b16 %v1594
        %v1636 = vunpack.c.l.b16 %v1595
        %v1637 = vunpack.c.l.b16 %v1596
        %v1638 = vunpack.c.l.b16 %v1597
        %v1639 = vunpack.c.l.b16 %v1598
        %v1640 = vunpack.c.l.b16 %v1599
        %v1641 = vunpack.c.l.b16 %v1600
        %v1642 = vunpack.c.l.b16 %v1601
        %v1643 = vunpack.c.l.b16 %v1602
        %v1644 = vunpack.c.l.b16 %v1603
        %v1645 = vunpack.c.l.b16 %v1604
        %v1646 = vunpack.c.l.b16 %v1605
        %v1647 = vpack.c.b16 %v1632, %v1631
        %v1648 = vpack.c.b16 %v1634, %v1633
        %v1649 = vpack.c.b16 %v1636, %v1635
        %v1650 = vpack.c.b16 %v1638, %v1637
        %v1651 = vpack.c.b16 %v1640, %v1639
        %v1652 = vpack.c.b16 %v1642, %v1641
        %v1653 = vpack.c.b16 %v1644, %v1643
        %v1654 = vpack.c.b16 %v1646, %v1645
        %1663 = vmatprep.subr.bf16.mxu0 0
        %1664 = vmatpush1.bf16.msra.mxu0 %v1647
        %1665 = vmatprep.subr.bf16.mxu0 0
        %1666 = vmatpush1.bf16.msra.mxu0 %v1648
        %1667 = vmatprep.subr.bf16.mxu0 0
        %1668 = vmatpush1.bf16.msra.mxu0 %v1649
        %1669 = vmatprep.subr.bf16.mxu0 0
        %1670 = vmatpush1.bf16.msra.mxu0 %v1650
        %1671 = vmatprep.subr.bf16.mxu0 0
        %1672 = vmatpush1.bf16.msra.mxu0 %v1651
        %1673 = vmatprep.subr.bf16.mxu0 0
        %1674 = vmatpush1.bf16.msra.mxu0 %v1652
        %1675 = vmatprep.subr.bf16.mxu0 0
        %1676 = vmatpush1.bf16.msra.mxu0 %v1653
        %1677 = vmatprep.subr.bf16.mxu0 0
        %1678 = vmatpush1.bf16.msra.mxu0 %v1654
        %1679 = vmatprep.subr.bf16.mxu0 0
        %1680 = vmatpush1.bf16.msra.mxu0 0
        %1681 = vmatprep.subr.bf16.mxu0 0
        %1682 = vmatpush1.bf16.msra.mxu0 0
        %1683 = vmatprep.subr.bf16.mxu0 0
        %1684 = vmatpush1.bf16.msra.mxu0 0
        %1685 = vmatprep.subr.bf16.mxu0 0
        %1686 = vmatpush1.bf16.msra.mxu0 0
        %1687 = vmatprep.subr.bf16.mxu0 0
        %1688 = vmatpush1.bf16.msra.mxu0 0
        %1689 = vmatprep.subr.bf16.mxu0 0
        %1690 = vmatpush1.bf16.msra.mxu0 0
        %1691 = vmatprep.subr.bf16.mxu0 0
        %1692 = vmatpush1.bf16.msra.mxu0 0
        %1693 = vmatprep.subr.bf16.mxu0 0
        %1694 = vmatpush1.bf16.msra.mxu0 0
        %1695 = vmatprep.mubr.bf16.mxu0 0
        %1696 = vmatmul.mubr.bf16.gmra.mrb[0].mxu0 %v1548
        %v1697 = vpop.f32.mrb[0].mxu0
        %v1698 = vadd.f32 %v1613, %v1697
        %v1699 = vpop.f32.mrb[0].mxu0
        %v1700 = vpop.f32.mrb[0].mxu0
        %v1701 = vpop.f32.mrb[0].mxu0
        %1702 = vdwg.mxu0
        %v1703 = vunpack.c.l.bf16 %v364
        %v1704 = vadd.f32 %v1703, %v1698
        %1705 = vadd.xlane.f32.xlu0 %v1704
        %v1706 = vpop.xlane.xlu0 %1705
        %v1707 = vrcp.pop 128.0
        %v1708 = vmul.f32 %v1706, %v1707
        %v1709 = vsub.f32 %v1704, %v1708
        %v1710 = vmul.f32 %v1709, %v1709
        %1711 = vadd.xlane.f32.xlu0 %v1710
        %v1712 = vpop.xlane.xlu0 %1711
        %v1713 = vmul.f32 %v1712, %v1707
        %v1714 = vadd.f32 %v1713, 1e-05
        %v1715 = vrsqrt.pop %v1714
        %v1716 = vmul.f32 %v1709, %v1715
        %v1718 = vlaneseq
        %v1719 = vshrl.u32 %v1718, 7
        %v1720 = vsub.s32 0, %v1719
        %v1721 = vrot.slane %v1607, %v1720
        %v1723 = vmul.f32 %v1716, %v1721
        %v1725 = vlaneseq
        %v1726 = vshrl.u32 %v1725, 7
        %v1727 = vsub.s32 0, %v1726
        %v1728 = vrot.slane %v1608, %v1727
        %v1730 = vadd.f32 %v1723, %v1728
        %v1731 = vpack.c.bf16 %v1730, %v1730
        %1732 = vst [vmem:[%s350] sm:$0xf] %v1731
        %s1733 = sand.u32 %s187, 1
        %s1734 = scalar_lea.sflag [#allocation4], %s1733
        %s1735 = sand.u32 %s187, 1
        %s1736 = smul.addr %s1735, 4
        %s1737 = scalar_lea.vmem [#allocation8], %s1736
        %p1738 = scmp.lt.s32.totalorder %s27, 1
        %s1739 = scalar_select %p1738, %s27, 1
        %s1740 = smul.addr %s1739, 8
        %s1741 = smul.addr %s1740, 4
        %s1742 = scalar_lea.vmem %s8, %s1741
        // Predicated region
        $region61: #{tpu_custom_call.1} parent=47 // pred_check
          %p1743 = pneg %p197
        $region62: #{tpu_custom_call.1} parent=47 // pred_check_branch
          %1745 = sbr.rel (%p1743) target = $region64
        $region63: #{tpu_custom_call.1} parent=47 // pred_region
          %s1747 = ssub.s32 64, 64
          %1748 = vsyncadd %s1734, %s1747
          %s1749 = smul.addr %s27, 64
          %s1750 = scalar_lea.hbm %s7, %s1749
          %s1752 = sshll.u32 %s1737, 4
          %s1753 = int_to_ptr.vmem [resolvable:$true] %s1752
          %1755 = dma.vmem_to_hbm [thread:$0]  %s1753, 64, %s1750, %s1734
        $region64: #{tpu_custom_call.1} parent=47 // pred_fallthru
          _
        // Predicated region
        $region65: #{tpu_custom_call.1} parent=47 // pred_check
          %p1756 = pneg %p223
        $region66: #{tpu_custom_call.1} parent=47 // pred_check_branch
          %1758 = sbr.rel (%p1756) target = $region68
        $region67: #{tpu_custom_call.1} parent=47 // pred_region
          _
        $region68: #{tpu_custom_call.1} parent=47 // pred_fallthru
          _
      $region48: #{tpu_custom_call.1} parent=5 // pred_fallthru
        _
      %p1759 = scmp.le.s32.totalorder 2, %s22
      // Predicated region
      $region69: #{tpu_custom_call.1} parent=5 // pred_check
        %p1760 = pneg %p1759
      $region70: #{tpu_custom_call.1} parent=5 // pred_check_branch
        %1762 = sbr.rel (%p1760) target = $region72
      $region71: #{tpu_custom_call.1} parent=5 // pred_region
        %s1763 = ssub.s32 %s22, 2
        // Predicated region
        $region73: #{tpu_custom_call.1} parent=71 // pred_check
          %p1764 = pneg %p203
        $region74: #{tpu_custom_call.1} parent=71 // pred_check_branch
          %1766 = sbr.rel (%p1764) target = $region76
        $region75: #{tpu_custom_call.1} parent=71 // pred_region
          %s1767 = sand.u32 %s188, 1
          %s1768 = scalar_lea.sflag [#allocation4], %s1767
          %s1769 = sand.u32 %s188, 1
          %s1770 = smul.addr %s1769, 4
          %s1771 = scalar_lea.vmem [#allocation8], %s1770
          %1772 = dma.done %s1768, 64
        $region76: #{tpu_custom_call.1} parent=71 // pred_fallthru
          _
        // Predicated region
        $region77: #{tpu_custom_call.1} parent=71 // pred_check
          %p1773 = pneg %p229
        $region78: #{tpu_custom_call.1} parent=71 // pred_check_branch
          %1775 = sbr.rel (%p1773) target = $region80
        $region79: #{tpu_custom_call.1} parent=71 // pred_region
          %p1776 = scmp.lt.s32.totalorder %s28, 1
          %s1777 = scalar_select %p1776, %s28, 1
          %s1778 = smul.addr %s1777, 8
          %s1779 = smul.addr %s1778, 4
          %s1780 = scalar_lea.vmem %s8, %s1779
        $region80: #{tpu_custom_call.1} parent=71 // pred_fallthru
          _
      $region72: #{tpu_custom_call.1} parent=5 // pred_fallthru
        _
    $region6: #{tpu_custom_call.1} parent=1 // loop_footer
      %s26 = sadd.s32 1, %s22
    $region7: #{tpu_custom_call.1} parent=1 // loop_footer_branch
      %21 = sbr.rel target = $region3
    $region8: #{tpu_custom_call.1} parent=1 // loop_exit
      _
    %1781 = vsyncpa [#allocation3], 1
    %s1782 = scalar_lea.sflag [#allocation3], 1
    %1783 = vsyncpa %s1782, 1
    %1784 = vsyncpa [#allocation6], 1
    %1785 = vsyncpa [#allocation4], 1
    %s1786 = scalar_lea.sflag [#allocation4], 1
    %1787 = vsyncpa %s1786, 1

</llo_original>
